<compile_context>
chip_gen: v6e
topology: v6e:2x2x1
jax: 0.10.0
libtpu: 0.0.40
codegen_flags: <defaults>
</compile_context>

<pallas_src>
import functools

import jax
import jax.numpy as jnp
from jax import lax
from jax.experimental import pallas as pl
from jax.experimental.pallas import tpu as pltpu


def _round_up(x, m):
    return (x + m - 1) // m * m


def _sigmoid(x):
    # sigmoid(x) == 0.5 * (1 + tanh(x/2)) : single EUP op instead of exp + reciprocal.
    return 0.5 * jnp.tanh(0.5 * x) + 0.5


def _lstm_linear_kernel(x_ref, wih_ref, whh_ref, b_ref, wlin_ref, blin_ref,
                        out_ref, h_scr, c_scr, xproj_scr, hs_scr,
                        *, tt, bp, hp):
    tb = pl.program_id(0)

    @pl.when(tb == 0)
    def _():
        h_scr[...] = jnp.zeros_like(h_scr)
        c_scr[...] = jnp.zeros_like(c_scr)

    # ---- Block-level input projection (hoisted out of the recurrence), bias folded in.
    #      One (TT*Bp, Ip) x (Ip, 4*Hp) MXU matmul instead of TT tiny M=Bp matmuls.
    xb = x_ref[...].reshape(tt * bp, -1)
    xproj_scr[...] = (
        jnp.dot(xb, wih_ref[...], preferred_element_type=jnp.float32) + b_ref[...]
    )

    # ---- Sequential recurrence over the TT timesteps of this block.
    #      Gate column layout: [ i | f | o | g ], each Hp lanes (128-aligned slices).
    def step(i, carry):
        h, c = carry
        row = pl.multiple_of(i * bp, bp)
        gates = xproj_scr[pl.ds(row, bp), :] + jnp.dot(
            h, whh_ref[...], preferred_element_type=jnp.float32)       # (Bp, 4*Hp)
        sifo = _sigmoid(gates[:, :3 * hp])                              # i,f,o in one slab
        i_g = sifo[:, 0 * hp:1 * hp]
        f_g = sifo[:, 1 * hp:2 * hp]
        o_g = sifo[:, 2 * hp:3 * hp]
        g_g = jnp.tanh(gates[:, 3 * hp:4 * hp])
        c_new = f_g * c + i_g * g_g
        h_new = o_g * jnp.tanh(c_new)
        hs_scr[pl.ds(row, bp), :] = h_new
        return h_new, c_new

    h_fin, c_fin = lax.fori_loop(0, tt, step, (h_scr[...], c_scr[...]), unroll=True)
    h_scr[...] = h_fin
    c_scr[...] = c_fin

    # ---- Block-level Linear (hoisted out of the recurrence), lane-dense store.
    y = (jnp.dot(hs_scr[...], wlin_ref[...], preferred_element_type=jnp.float32)
         + blin_ref[...])                                               # (TT*Bp, Op)
    out_ref[...] = y.reshape(tt, bp, -1).astype(out_ref.dtype)


def recurrent_block(x, params, *, time_block=8):
    """x: (T, B, in_dim) float32. params: dict of LSTM + Linear weights (PyTorch shapes)."""
    T, B, in_dim = x.shape
    w_ih = params["w_ih"]          # (4H, in_dim)   rows ordered i,f,g,o (PyTorch)
    w_hh = params["w_hh"]          # (4H, H)
    b_ih = params["b_ih"]          # (4H,)
    b_hh = params["b_hh"]          # (4H,)
    w_lin = params["w_lin"]        # (out_dim, H)
    b_lin = params["b_lin"]        # (out_dim,)

    H = w_hh.shape[1]
    out_dim = w_lin.shape[0]
    f32 = jnp.float32

    # Lane/sublane-aligned padded sizes.
    Hp = _round_up(H, 128)
    Ip = _round_up(in_dim, 128)
    Op = _round_up(out_dim, 128)
    Bp = _round_up(B, 8)
    TT = min(time_block, T)
    Tp = _round_up(T, TT)

    # Reorder PyTorch gate blocks (i, f, g, o) -> kernel layout (i, f, o, g) so the
    # three sigmoid gates form one contiguous 3*Hp lane slab.
    perm = jnp.array([0, 1, 3, 2])

    # ---- Plain-JAX glue: pre-transpose, fuse biases, pad so gate k occupies the
    #      128-aligned column block [k*Hp, (k+1)*Hp) of the (.., 4*Hp) weights.
    wih_g = jnp.transpose(w_ih.astype(f32).reshape(4, H, in_dim), (2, 0, 1))  # (in,4,H)
    wih_g = wih_g[:, perm, :]
    wih_p = jnp.zeros((Ip, 4, Hp), f32).at[:in_dim, :, :H].set(wih_g).reshape(Ip, 4 * Hp)

    whh_g = jnp.transpose(w_hh.astype(f32).reshape(4, H, H), (2, 0, 1))       # (H,4,H)
    whh_g = whh_g[:, perm, :]
    whh_p = jnp.zeros((Hp, 4, Hp), f32).at[:H, :, :H].set(whh_g).reshape(Hp, 4 * Hp)

    b_g = (b_ih + b_hh).astype(f32).reshape(4, H)[perm, :]
    b_p = jnp.zeros((4, Hp), f32).at[:, :H].set(b_g).reshape(1, 4 * Hp)

    wlin_p = jnp.zeros((Hp, Op), f32).at[:H, :out_dim].set(w_lin.astype(f32).T)
    blin_p = jnp.zeros((1, Op), f32).at[0, :out_dim].set(b_lin.astype(f32))

    x_p = jnp.zeros((Tp, Bp, Ip), f32).at[:T, :B, :in_dim].set(x.astype(f32))

    kernel = functools.partial(_lstm_linear_kernel, tt=TT, bp=Bp, hp=Hp)

    def resident_spec(shape):
        nd = len(shape)

        def idx(t):
            return (0,) * nd

        return pl.BlockSpec(shape, idx)

    out_p = pl.pallas_call(
        kernel,
        out_shape=jax.ShapeDtypeStruct((Tp, Bp, Op), x.dtype),
        grid_spec=pltpu.PrefetchScalarGridSpec(
            num_scalar_prefetch=0,
            grid=(Tp // TT,),
            in_specs=[
                pl.BlockSpec((TT, Bp, Ip), lambda t: (t, 0, 0)),   # x, one time block
                resident_spec(wih_p.shape),    # (Ip, 4*Hp)   resident weights
                resident_spec(whh_p.shape),    # (Hp, 4*Hp)
                resident_spec(b_p.shape),      # (1, 4*Hp)
                resident_spec(wlin_p.shape),   # (Hp, Op)
                resident_spec(blin_p.shape),   # (1, Op)
            ],
            out_specs=pl.BlockSpec((TT, Bp, Op), lambda t: (t, 0, 0)),
            scratch_shapes=[
                pltpu.VMEM((Bp, Hp), f32),            # h state (carried across blocks)
                pltpu.VMEM((Bp, Hp), f32),            # c state
                pltpu.VMEM((TT * Bp, 4 * Hp), f32),   # per-block input projection
                pltpu.VMEM((TT * Bp, Hp), f32),       # per-block hidden states
            ],
        ),
        compiler_params=pltpu.CompilerParams(
            dimension_semantics=("arbitrary",),       # time recurrence is sequential
        ),
    )(x_p, wih_p, whh_p, b_p, wlin_p, blin_p)

    return out_p[:T, :B, :out_dim]


def _reference(x, params):
    """Pure-JAX reference mirroring nn.LSTM(num_layers=1, bidirectional=False) + Linear."""
    H = params["w_hh"].shape[1]
    wih_t = params["w_ih"].T
    whh_t = params["w_hh"].T
    b = params["b_ih"] + params["b_hh"]

    def step(carry, x_t):
        h, c = carry
        gates = x_t @ wih_t + h @ whh_t + b
        i = jax.nn.sigmoid(gates[:, 0 * H:1 * H])
        f = jax.nn.sigmoid(gates[:, 1 * H:2 * H])
        g = jnp.tanh(gates[:, 2 * H:3 * H])
        o = jax.nn.sigmoid(gates[:, 3 * H:4 * H])
        c_new = f * c + i * g
        h_new = o * jnp.tanh(c_new)
        return (h_new, c_new), h_new

    B = x.shape[1]
    init = (jnp.zeros((B, H), jnp.float32), jnp.zeros((B, H), jnp.float32))
    _, hs = jax.lax.scan(step, init, x)                    # (T, B, H)
    return hs @ params["w_lin"].T + params["b_lin"]        # (T, B, out_dim)


def init_params(key, in_dim, hidden_dim, out_dim):
    """Deterministic init matching PyTorch shapes (uniform +-1/sqrt(hidden))."""
    ks = jax.random.split(key, 6)
    s = 1.0 / jnp.sqrt(hidden_dim)
    u = lambda k, shape: jax.random.uniform(k, shape, jnp.float32, -s, s)
    return {
        "w_ih": u(ks[0], (4 * hidden_dim, in_dim)),
        "w_hh": u(ks[1], (4 * hidden_dim, hidden_dim)),
        "b_ih": u(ks[2], (4 * hidden_dim,)),
        "b_hh": u(ks[3], (4 * hidden_dim,)),
        "w_lin": u(ks[4], (out_dim, hidden_dim)),
        "b_lin": u(ks[5], (out_dim,)),
    }


if __name__ == "__main__":
    T, B, IN, HID, OUT = 8, 2, 16, 32, 16

    key = jax.random.PRNGKey(0)
    k_x, k_p = jax.random.split(key)
    x = jax.random.normal(k_x, (T, B, IN), jnp.float32)
    params = init_params(k_p, IN, HID, OUT)

    # time_block=4 -> grid=(2,): exercises both multi-step blocks and the h/c carry
    # across sequential grid steps.
    out = recurrent_block(x, params, time_block=4)
    out = jax.block_until_ready(out)

    ref = _reference(x, params)
    assert out.shape == (T, B, OUT)
    assert jnp.allclose(out, ref, atol=2e-5, rtol=1e-5), float(jnp.max(jnp.abs(out - ref)))

    print("KERNEL_OK")
</pallas_src>

<mosaic_0001>
module attributes {stable_mosaic.version = 11 : i64} {
  func.func @_lstm_linear_kernel(%arg0: i32, %arg1: memref<4x8x128xf32, #tpu.memory_space<vmem>>, %arg2: memref<128x512xf32, #tpu.memory_space<vmem>>, %arg3: memref<128x512xf32, #tpu.memory_space<vmem>>, %arg4: memref<1x512xf32, #tpu.memory_space<vmem>>, %arg5: memref<128x128xf32, #tpu.memory_space<vmem>>, %arg6: memref<1x128xf32, #tpu.memory_space<vmem>>, %arg7: memref<4x8x128xf32, #tpu.memory_space<vmem>>, %arg8: memref<8x128xf32, #tpu.memory_space<vmem>>, %arg9: memref<8x128xf32, #tpu.memory_space<vmem>>, %arg10: memref<32x512xf32, #tpu.memory_space<vmem>>, %arg11: memref<32x128xf32, #tpu.memory_space<vmem>>) attributes {dimension_semantics = [#tpu.dimension_semantics<arbitrary>], iteration_bounds = array<i64: 2>, scalar_prefetch = 0 : i64, scratch_operands = 4 : i64, tpu.core_type = #tpu.core_type<tc>, window_params = [{transform_indices = @transform_0, window_bounds = array<i64: 4, 8, 128>}, {pipeline_mode = #tpu.pipeline_mode<synchronous>, transform_indices = @transform_1, window_bounds = array<i64: 128, 512>}, {pipeline_mode = #tpu.pipeline_mode<synchronous>, transform_indices = @transform_2, window_bounds = array<i64: 128, 512>}, {pipeline_mode = #tpu.pipeline_mode<synchronous>, transform_indices = @transform_3, window_bounds = array<i64: 1, 512>}, {pipeline_mode = #tpu.pipeline_mode<synchronous>, transform_indices = @transform_4, window_bounds = array<i64: 128, 128>}, {pipeline_mode = #tpu.pipeline_mode<synchronous>, transform_indices = @transform_5, window_bounds = array<i64: 1, 128>}, {transform_indices = @transform_6, window_bounds = array<i64: 4, 8, 128>}]} {
    %c0_i32 = arith.constant 0 : i32
    %0 = arith.cmpi eq, %arg0, %c0_i32 : i32
    %1 = arith.extui %0 : i1 to i32
    %c0_i32_0 = arith.constant 0 : i32
    %2 = arith.cmpi ne, %1, %c0_i32_0 : i32
    scf.if %2 {
      %cst_63 = arith.constant 0.000000e+00 : f32
      %131 = vector.broadcast %cst_63 : f32 to vector<8x128xf32>
      %c0_64 = arith.constant 0 : index
      %c0_65 = arith.constant 0 : index
      %132 = vector.load %arg8[%c0_64, %c0_65] : memref<8x128xf32, #tpu.memory_space<vmem>>, vector<8x128xf32>
      tpu.vector_store %arg8[%c0_64, %c0_65], %131 {strides = array<i32>} : memref<8x128xf32, #tpu.memory_space<vmem>>, vector<8x128xf32>,
      %cst_66 = arith.constant 0.000000e+00 : f32
      %133 = vector.broadcast %cst_66 : f32 to vector<8x128xf32>
      %c0_67 = arith.constant 0 : index
      %c0_68 = arith.constant 0 : index
      %134 = vector.load %arg9[%c0_67, %c0_68] : memref<8x128xf32, #tpu.memory_space<vmem>>, vector<8x128xf32>
      tpu.vector_store %arg9[%c0_67, %c0_68], %133 {strides = array<i32>} : memref<8x128xf32, #tpu.memory_space<vmem>>, vector<8x128xf32>,
    } else {
    }
    %c0 = arith.constant 0 : index
    %c0_1 = arith.constant 0 : index
    %c0_2 = arith.constant 0 : index
    %3 = vector.load %arg1[%c0, %c0_1, %c0_2] : memref<4x8x128xf32, #tpu.memory_space<vmem>>, vector<4x8x128xf32>
    %4 = vector.shape_cast %3 : vector<4x8x128xf32> to vector<32x128xf32>
    %c0_3 = arith.constant 0 : index
    %c0_4 = arith.constant 0 : index
    %5 = vector.load %arg2[%c0_3, %c0_4] : memref<128x512xf32, #tpu.memory_space<vmem>>, vector<128x512xf32>
    %cst = arith.constant dense<0.000000e+00> : vector<32x512xf32>
    %6 = tpu.matmul %4, %5, %cst {dimension_numbers = #tpu.dot_dimension_numbers<[1], [0], [0], [1], [0, 0, 1, 1], [], []>} : vector<32x128xf32>, vector<128x512xf32>, vector<32x512xf32> -> vector<32x512xf32>
    %c0_5 = arith.constant 0 : index
    %c0_6 = arith.constant 0 : index
    %7 = vector.load %arg4[%c0_5, %c0_6] : memref<1x512xf32, #tpu.memory_space<vmem>>, vector<1x512xf32>
    %8 = vector.broadcast %7 : vector<1x512xf32> to vector<32x512xf32>
    %9 = arith.addf %6, %8 : vector<32x512xf32>
    %c0_7 = arith.constant 0 : index
    %c0_8 = arith.constant 0 : index
    %10 = vector.load %arg10[%c0_7, %c0_8] : memref<32x512xf32, #tpu.memory_space<vmem>>, vector<32x512xf32>
    tpu.vector_store %arg10[%c0_7, %c0_8], %9 {strides = array<i32>} : memref<32x512xf32, #tpu.memory_space<vmem>>, vector<32x512xf32>,
    %c0_9 = arith.constant 0 : index
    %c0_10 = arith.constant 0 : index
    %11 = vector.load %arg8[%c0_9, %c0_10] : memref<8x128xf32, #tpu.memory_space<vmem>>, vector<8x128xf32>
    %c0_11 = arith.constant 0 : index
    %c0_12 = arith.constant 0 : index
    %12 = vector.load %arg9[%c0_11, %c0_12] : memref<8x128xf32, #tpu.memory_space<vmem>>, vector<8x128xf32>
    %c0_i32_13 = arith.constant 0 : i32
    %c8_i32 = arith.constant 8 : i32
    %13 = arith.muli %c0_i32_13, %c8_i32 : i32
    %14 = tpu.assume_multiple %13, 8 : i32
    %15 = arith.index_cast %14 : i32 to index
    %c0_14 = arith.constant 0 : index
    %16 = vector.load %arg10[%15, %c0_14] : memref<32x512xf32, #tpu.memory_space<vmem>>, vector<8x512xf32>
    %c0_15 = arith.constant 0 : index
    %c0_16 = arith.constant 0 : index
    %17 = vector.load %arg3[%c0_15, %c0_16] : memref<128x512xf32, #tpu.memory_space<vmem>>, vector<128x512xf32>
    %cst_17 = arith.constant dense<0.000000e+00> : vector<8x512xf32>
    %18 = tpu.matmul %11, %17, %cst_17 {dimension_numbers = #tpu.dot_dimension_numbers<[1], [0], [0], [1], [0, 0, 1, 1], [], []>} : vector<8x128xf32>, vector<128x512xf32>, vector<8x512xf32> -> vector<8x512xf32>
    %19 = arith.addf %16, %18 : vector<8x512xf32>
    %20 = vector.extract_strided_slice %19 {offsets = [0, 0], sizes = [8, 384], strides = [1, 1]} : vector<8x512xf32> to vector<8x384xf32>
    %cst_18 = arith.constant 5.000000e-01 : f32
    %21 = vector.broadcast %cst_18 : f32 to vector<8x384xf32>
    %22 = arith.mulf %21, %20 : vector<8x384xf32>
    %23 = math.tanh %22 : vector<8x384xf32>
    %cst_19 = arith.constant 5.000000e-01 : f32
    %24 = vector.broadcast %cst_19 : f32 to vector<8x384xf32>
    %25 = arith.mulf %24, %23 : vector<8x384xf32>
    %cst_20 = arith.constant 5.000000e-01 : f32
    %26 = vector.broadcast %cst_20 : f32 to vector<8x384xf32>
    %27 = arith.addf %25, %26 : vector<8x384xf32>
    %28 = vector.extract_strided_slice %27 {offsets = [0, 0], sizes = [8, 128], strides = [1, 1]} : vector<8x384xf32> to vector<8x128xf32>
    %29 = vector.extract_strided_slice %27 {offsets = [0, 128], sizes = [8, 128], strides = [1, 1]} : vector<8x384xf32> to vector<8x128xf32>
    %30 = vector.extract_strided_slice %27 {offsets = [0, 256], sizes = [8, 128], strides = [1, 1]} : vector<8x384xf32> to vector<8x128xf32>
    %31 = vector.extract_strided_slice %19 {offsets = [0, 384], sizes = [8, 128], strides = [1, 1]} : vector<8x512xf32> to vector<8x128xf32>
    %32 = math.tanh %31 : vector<8x128xf32>
    %33 = arith.mulf %29, %12 : vector<8x128xf32>
    %34 = arith.mulf %28, %32 : vector<8x128xf32>
    %35 = arith.addf %33, %34 : vector<8x128xf32>
    %36 = math.tanh %35 : vector<8x128xf32>
    %37 = arith.mulf %30, %36 : vector<8x128xf32>
    %38 = arith.index_cast %14 : i32 to index
    %c0_21 = arith.constant 0 : index
    %39 = vector.load %arg11[%38, %c0_21] : memref<32x128xf32, #tpu.memory_space<vmem>>, vector<8x128xf32>
    tpu.vector_store %arg11[%38, %c0_21], %37 {strides = array<i32>} : memref<32x128xf32, #tpu.memory_space<vmem>>, vector<8x128xf32>,
    %c1_i32 = arith.constant 1 : i32
    %c8_i32_22 = arith.constant 8 : i32
    %40 = arith.muli %c1_i32, %c8_i32_22 : i32
    %41 = tpu.assume_multiple %40, 8 : i32
    %42 = arith.index_cast %41 : i32 to index
    %c0_23 = arith.constant 0 : index
    %43 = vector.load %arg10[%42, %c0_23] : memref<32x512xf32, #tpu.memory_space<vmem>>, vector<8x512xf32>
    %c0_24 = arith.constant 0 : index
    %c0_25 = arith.constant 0 : index
    %44 = vector.load %arg3[%c0_24, %c0_25] : memref<128x512xf32, #tpu.memory_space<vmem>>, vector<128x512xf32>
    %cst_26 = arith.constant dense<0.000000e+00> : vector<8x512xf32>
    %45 = tpu.matmul %37, %44, %cst_26 {dimension_numbers = #tpu.dot_dimension_numbers<[1], [0], [0], [1], [0, 0, 1, 1], [], []>} : vector<8x128xf32>, vector<128x512xf32>, vector<8x512xf32> -> vector<8x512xf32>
    %46 = arith.addf %43, %45 : vector<8x512xf32>
    %47 = vector.extract_strided_slice %46 {offsets = [0, 0], sizes = [8, 384], strides = [1, 1]} : vector<8x512xf32> to vector<8x384xf32>
    %cst_27 = arith.constant 5.000000e-01 : f32
    %48 = vector.broadcast %cst_27 : f32 to vector<8x384xf32>
    %49 = arith.mulf %48, %47 : vector<8x384xf32>
    %50 = math.tanh %49 : vector<8x384xf32>
    %cst_28 = arith.constant 5.000000e-01 : f32
    %51 = vector.broadcast %cst_28 : f32 to vector<8x384xf32>
    %52 = arith.mulf %51, %50 : vector<8x384xf32>
    %cst_29 = arith.constant 5.000000e-01 : f32
    %53 = vector.broadcast %cst_29 : f32 to vector<8x384xf32>
    %54 = arith.addf %52, %53 : vector<8x384xf32>
    %55 = vector.extract_strided_slice %54 {offsets = [0, 0], sizes = [8, 128], strides = [1, 1]} : vector<8x384xf32> to vector<8x128xf32>
    %56 = vector.extract_strided_slice %54 {offsets = [0, 128], sizes = [8, 128], strides = [1, 1]} : vector<8x384xf32> to vector<8x128xf32>
    %57 = vector.extract_strided_slice %54 {offsets = [0, 256], sizes = [8, 128], strides = [1, 1]} : vector<8x384xf32> to vector<8x128xf32>
    %58 = vector.extract_strided_slice %46 {offsets = [0, 384], sizes = [8, 128], strides = [1, 1]} : vector<8x512xf32> to vector<8x128xf32>
    %59 = math.tanh %58 : vector<8x128xf32>
    %60 = arith.mulf %56, %35 : vector<8x128xf32>
    %61 = arith.mulf %55, %59 : vector<8x128xf32>
    %62 = arith.addf %60, %61 : vector<8x128xf32>
    %63 = math.tanh %62 : vector<8x128xf32>
    %64 = arith.mulf %57, %63 : vector<8x128xf32>
    %65 = arith.index_cast %41 : i32 to index
    %c0_30 = arith.constant 0 : index
    %66 = vector.load %arg11[%65, %c0_30] : memref<32x128xf32, #tpu.memory_space<vmem>>, vector<8x128xf32>
    tpu.vector_store %arg11[%65, %c0_30], %64 {strides = array<i32>} : memref<32x128xf32, #tpu.memory_space<vmem>>, vector<8x128xf32>,
    %c2_i32 = arith.constant 2 : i32
    %c8_i32_31 = arith.constant 8 : i32
    %67 = arith.muli %c2_i32, %c8_i32_31 : i32
    %68 = tpu.assume_multiple %67, 8 : i32
    %69 = arith.index_cast %68 : i32 to index
    %c0_32 = arith.constant 0 : index
    %70 = vector.load %arg10[%69, %c0_32] : memref<32x512xf32, #tpu.memory_space<vmem>>, vector<8x512xf32>
    %c0_33 = arith.constant 0 : index
    %c0_34 = arith.constant 0 : index
    %71 = vector.load %arg3[%c0_33, %c0_34] : memref<128x512xf32, #tpu.memory_space<vmem>>, vector<128x512xf32>
    %cst_35 = arith.constant dense<0.000000e+00> : vector<8x512xf32>
    %72 = tpu.matmul %64, %71, %cst_35 {dimension_numbers = #tpu.dot_dimension_numbers<[1], [0], [0], [1], [0, 0, 1, 1], [], []>} : vector<8x128xf32>, vector<128x512xf32>, vector<8x512xf32> -> vector<8x512xf32>
    %73 = arith.addf %70, %72 : vector<8x512xf32>
    %74 = vector.extract_strided_slice %73 {offsets = [0, 0], sizes = [8, 384], strides = [1, 1]} : vector<8x512xf32> to vector<8x384xf32>
    %cst_36 = arith.constant 5.000000e-01 : f32
    %75 = vector.broadcast %cst_36 : f32 to vector<8x384xf32>
    %76 = arith.mulf %75, %74 : vector<8x384xf32>
    %77 = math.tanh %76 : vector<8x384xf32>
    %cst_37 = arith.constant 5.000000e-01 : f32
    %78 = vector.broadcast %cst_37 : f32 to vector<8x384xf32>
    %79 = arith.mulf %78, %77 : vector<8x384xf32>
    %cst_38 = arith.constant 5.000000e-01 : f32
    %80 = vector.broadcast %cst_38 : f32 to vector<8x384xf32>
    %81 = arith.addf %79, %80 : vector<8x384xf32>
    %82 = vector.extract_strided_slice %81 {offsets = [0, 0], sizes = [8, 128], strides = [1, 1]} : vector<8x384xf32> to vector<8x128xf32>
    %83 = vector.extract_strided_slice %81 {offsets = [0, 128], sizes = [8, 128], strides = [1, 1]} : vector<8x384xf32> to vector<8x128xf32>
    %84 = vector.extract_strided_slice %81 {offsets = [0, 256], sizes = [8, 128], strides = [1, 1]} : vector<8x384xf32> to vector<8x128xf32>
    %85 = vector.extract_strided_slice %73 {offsets = [0, 384], sizes = [8, 128], strides = [1, 1]} : vector<8x512xf32> to vector<8x128xf32>
    %86 = math.tanh %85 : vector<8x128xf32>
    %87 = arith.mulf %83, %62 : vector<8x128xf32>
    %88 = arith.mulf %82, %86 : vector<8x128xf32>
    %89 = arith.addf %87, %88 : vector<8x128xf32>
    %90 = math.tanh %89 : vector<8x128xf32>
    %91 = arith.mulf %84, %90 : vector<8x128xf32>
    %92 = arith.index_cast %68 : i32 to index
    %c0_39 = arith.constant 0 : index
    %93 = vector.load %arg11[%92, %c0_39] : memref<32x128xf32, #tpu.memory_space<vmem>>, vector<8x128xf32>
    tpu.vector_store %arg11[%92, %c0_39], %91 {strides = array<i32>} : memref<32x128xf32, #tpu.memory_space<vmem>>, vector<8x128xf32>,
    %c3_i32 = arith.constant 3 : i32
    %c8_i32_40 = arith.constant 8 : i32
    %94 = arith.muli %c3_i32, %c8_i32_40 : i32
    %95 = tpu.assume_multiple %94, 8 : i32
    %96 = arith.index_cast %95 : i32 to index
    %c0_41 = arith.constant 0 : index
    %97 = vector.load %arg10[%96, %c0_41] : memref<32x512xf32, #tpu.memory_space<vmem>>, vector<8x512xf32>
    %c0_42 = arith.constant 0 : index
    %c0_43 = arith.constant 0 : index
    %98 = vector.load %arg3[%c0_42, %c0_43] : memref<128x512xf32, #tpu.memory_space<vmem>>, vector<128x512xf32>
    %cst_44 = arith.constant dense<0.000000e+00> : vector<8x512xf32>
    %99 = tpu.matmul %91, %98, %cst_44 {dimension_numbers = #tpu.dot_dimension_numbers<[1], [0], [0], [1], [0, 0, 1, 1], [], []>} : vector<8x128xf32>, vector<128x512xf32>, vector<8x512xf32> -> vector<8x512xf32>
    %100 = arith.addf %97, %99 : vector<8x512xf32>
    %101 = vector.extract_strided_slice %100 {offsets = [0, 0], sizes = [8, 384], strides = [1, 1]} : vector<8x512xf32> to vector<8x384xf32>
    %cst_45 = arith.constant 5.000000e-01 : f32
    %102 = vector.broadcast %cst_45 : f32 to vector<8x384xf32>
    %103 = arith.mulf %102, %101 : vector<8x384xf32>
    %104 = math.tanh %103 : vector<8x384xf32>
    %cst_46 = arith.constant 5.000000e-01 : f32
    %105 = vector.broadcast %cst_46 : f32 to vector<8x384xf32>
    %106 = arith.mulf %105, %104 : vector<8x384xf32>
    %cst_47 = arith.constant 5.000000e-01 : f32
    %107 = vector.broadcast %cst_47 : f32 to vector<8x384xf32>
    %108 = arith.addf %106, %107 : vector<8x384xf32>
    %109 = vector.extract_strided_slice %108 {offsets = [0, 0], sizes = [8, 128], strides = [1, 1]} : vector<8x384xf32> to vector<8x128xf32>
    %110 = vector.extract_strided_slice %108 {offsets = [0, 128], sizes = [8, 128], strides = [1, 1]} : vector<8x384xf32> to vector<8x128xf32>
    %111 = vector.extract_strided_slice %108 {offsets = [0, 256], sizes = [8, 128], strides = [1, 1]} : vector<8x384xf32> to vector<8x128xf32>
    %112 = vector.extract_strided_slice %100 {offsets = [0, 384], sizes = [8, 128], strides = [1, 1]} : vector<8x512xf32> to vector<8x128xf32>
    %113 = math.tanh %112 : vector<8x128xf32>
    %114 = arith.mulf %110, %89 : vector<8x128xf32>
    %115 = arith.mulf %109, %113 : vector<8x128xf32>
    %116 = arith.addf %114, %115 : vector<8x128xf32>
    %117 = math.tanh %116 : vector<8x128xf32>
    %118 = arith.mulf %111, %117 : vector<8x128xf32>
    %119 = arith.index_cast %95 : i32 to index
    %c0_48 = arith.constant 0 : index
    %120 = vector.load %arg11[%119, %c0_48] : memref<32x128xf32, #tpu.memory_space<vmem>>, vector<8x128xf32>
    tpu.vector_store %arg11[%119, %c0_48], %118 {strides = array<i32>} : memref<32x128xf32, #tpu.memory_space<vmem>>, vector<8x128xf32>,
    %c4_i32 = arith.constant 4 : i32
    %c0_49 = arith.constant 0 : index
    %c0_50 = arith.constant 0 : index
    %121 = vector.load %arg8[%c0_49, %c0_50] : memref<8x128xf32, #tpu.memory_space<vmem>>, vector<8x128xf32>
    tpu.vector_store %arg8[%c0_49, %c0_50], %118 {strides = array<i32>} : memref<8x128xf32, #tpu.memory_space<vmem>>, vector<8x128xf32>,
    %c0_51 = arith.constant 0 : index
    %c0_52 = arith.constant 0 : index
    %122 = vector.load %arg9[%c0_51, %c0_52] : memref<8x128xf32, #tpu.memory_space<vmem>>, vector<8x128xf32>
    tpu.vector_store %arg9[%c0_51, %c0_52], %116 {strides = array<i32>} : memref<8x128xf32, #tpu.memory_space<vmem>>, vector<8x128xf32>,
    %c0_53 = arith.constant 0 : index
    %c0_54 = arith.constant 0 : index
    %123 = vector.load %arg11[%c0_53, %c0_54] : memref<32x128xf32, #tpu.memory_space<vmem>>, vector<32x128xf32>
    %c0_55 = arith.constant 0 : index
    %c0_56 = arith.constant 0 : index
    %124 = vector.load %arg5[%c0_55, %c0_56] : memref<128x128xf32, #tpu.memory_space<vmem>>, vector<128x128xf32>
    %cst_57 = arith.constant dense<0.000000e+00> : vector<32x128xf32>
    %125 = tpu.matmul %123, %124, %cst_57 {dimension_numbers = #tpu.dot_dimension_numbers<[1], [0], [0], [1], [0, 0, 1, 1], [], []>} : vector<32x128xf32>, vector<128x128xf32>, vector<32x128xf32> -> vector<32x128xf32>
    %c0_58 = arith.constant 0 : index
    %c0_59 = arith.constant 0 : index
    %126 = vector.load %arg6[%c0_58, %c0_59] : memref<1x128xf32, #tpu.memory_space<vmem>>, vector<1x128xf32>
    %127 = vector.broadcast %126 : vector<1x128xf32> to vector<32x128xf32>
    %128 = arith.addf %125, %127 : vector<32x128xf32>
    %129 = vector.shape_cast %128 : vector<32x128xf32> to vector<4x8x128xf32>
    %c0_60 = arith.constant 0 : index
    %c0_61 = arith.constant 0 : index
    %c0_62 = arith.constant 0 : index
    %130 = vector.load %arg7[%c0_60, %c0_61, %c0_62] : memref<4x8x128xf32, #tpu.memory_space<vmem>>, vector<4x8x128xf32>
    tpu.vector_store %arg7[%c0_60, %c0_61, %c0_62], %129 {strides = array<i32>} : memref<4x8x128xf32, #tpu.memory_space<vmem>>, vector<4x8x128xf32>,
    return
  }
  func.func @transform_0(%arg0: i32) -> (i32, i32, i32) {
    %c0_i32 = arith.constant 0 : i32
    %c0_i32_0 = arith.constant 0 : i32
    %c0_i32_1 = arith.constant 0 : i32
    return %arg0, %c0_i32, %c0_i32_0 : i32, i32, i32
  }
  func.func @transform_1(%arg0: i32) -> (i32, i32) {
    %c0_i32 = arith.constant 0 : i32
    %c0_i32_0 = arith.constant 0 : i32
    %c0_i32_1 = arith.constant 0 : i32
    return %c0_i32, %c0_i32_0 : i32, i32
  }
  func.func @transform_2(%arg0: i32) -> (i32, i32) {
    %c0_i32 = arith.constant 0 : i32
    %c0_i32_0 = arith.constant 0 : i32
    %c0_i32_1 = arith.constant 0 : i32
    return %c0_i32, %c0_i32_0 : i32, i32
  }
  func.func @transform_3(%arg0: i32) -> (i32, i32) {
    %c0_i32 = arith.constant 0 : i32
    %c0_i32_0 = arith.constant 0 : i32
    %c0_i32_1 = arith.constant 0 : i32
    return %c0_i32, %c0_i32_0 : i32, i32
  }
  func.func @transform_4(%arg0: i32) -> (i32, i32) {
    %c0_i32 = arith.constant 0 : i32
    %c0_i32_0 = arith.constant 0 : i32
    %c0_i32_1 = arith.constant 0 : i32
    return %c0_i32, %c0_i32_0 : i32, i32
  }
  func.func @transform_5(%arg0: i32) -> (i32, i32) {
    %c0_i32 = arith.constant 0 : i32
    %c0_i32_0 = arith.constant 0 : i32
    %c0_i32_1 = arith.constant 0 : i32
    return %c0_i32, %c0_i32_0 : i32, i32
  }
  func.func @transform_6(%arg0: i32) -> (i32, i32, i32) {
    %c0_i32 = arith.constant 0 : i32
    %c0_i32_0 = arith.constant 0 : i32
    %c0_i32_1 = arith.constant 0 : i32
    return %arg0, %c0_i32, %c0_i32_0 : i32, i32, i32
  }
}

</mosaic_0001>

<llo_original>
// kernel: tpu_custom_call.1
$region0: #{tpu_custom_call.1}
  #allocation0 [shape = 'u32[]', space=smem, size = 0x4, offset = 0x4, fixed_abs, tag = 'smem constant byte address 0x4 - core index']
  #allocation1 [shape = 'u32[144,128]{1,0:T(1,128)}', space=vmem, size = 0x12000, scoped, tag = 'internal scratch']
  #allocation2 [shape = 'f32[8,128]{1,0:T(8,128)}', space=vmem, size = 0x1000, scoped, tag = 'scratch operand']
  #allocation3 [shape = 'f32[8,128]{1,0:T(8,128)}', space=vmem, size = 0x1000, scoped, tag = 'scratch operand']
  #allocation4 [shape = 'f32[32,512]{1,0:T(8,128)}', space=vmem, size = 0x10000, scoped, tag = 'scratch operand']
  #allocation5 [shape = 'f32[32,128]{1,0:T(8,128)}', space=vmem, size = 0x4000, scoped, tag = 'scratch operand']
  %s0 = inlined_call_operand.hbm [shape: f32[8,8,128], index: 0, kind: input, shape index: {}]
  %s1 = inlined_call_operand.hbm [shape: f32[128,512], index: 1, kind: input, shape index: {}]
  %s2 = inlined_call_operand.hbm [shape: f32[128,512], index: 2, kind: input, shape index: {}]
  %s3 = inlined_call_operand.vmem [shape: f32[1,512], index: 3, kind: input, shape index: {}]
  %s4 = inlined_call_operand.hbm [shape: f32[128,128], index: 4, kind: input, shape index: {}]
  %s5 = inlined_call_operand.vmem [shape: f32[1,128], index: 5, kind: input, shape index: {}]
  %s6 = inlined_call_operand.hbm [shape: f32[8,8,128], index: 6, kind: output, shape index: {}]
  %s7 = sld [smem:[#allocation0]]
  $region77: #{tpu_custom_call.1} parent=0
    _
  %s9 = ssub.s32 1, %s7
  %s10 = scalar_select 0, %s9, %s7
  $region1: #{tpu_custom_call.1} parent=0
    #allocation6 [shape = 'u8[32768]{0}', space=vmem, size = 0x8000, scoped, tag = 'input window, operand 0']
    #allocation7 [shape = 's32[2]{0}', space=sflag, size = 0x8, scoped, tag = 'scoped memory for tpu_custom_call.1']
    #allocation8 [shape = 's32[2]{0}', space=sflag, size = 0x8, scoped, tag = 'scoped memory for tpu_custom_call.1']
    #allocation9 [shape = 'u8[262144]{0}', space=vmem, size = 0x40000, scoped, tag = 'input window, operand 1, single buffered']
    #allocation10 [shape = 's32[1]{0}', space=sflag, size = 0x4, scoped, tag = 'scoped memory for tpu_custom_call.1']
    #allocation11 [shape = 'u8[262144]{0}', space=vmem, size = 0x40000, scoped, tag = 'input window, operand 2, single buffered']
    #allocation12 [shape = 'u8[65536]{0}', space=vmem, size = 0x10000, scoped, tag = 'input window, operand 4, single buffered']
    #allocation13 [shape = 's32[1]{0}', space=sflag, size = 0x4, scoped, tag = 'scoped memory for tpu_custom_call.1']
    #allocation14 [shape = 'u8[32768]{0}', space=vmem, size = 0x8000, scoped, tag = 'output window, operand 0']
    %11 = vsyncpa [#allocation7], 0
    %s12 = scalar_lea.sflag [#allocation7], 1
    %13 = vsyncpa %s12, 0
    %14 = vsyncpa [#allocation10], 0
    %15 = vsyncpa [#allocation13], 0
    %16 = vsyncpa [#allocation8], 0
    %s17 = scalar_lea.sflag [#allocation8], 1
    %18 = vsyncpa %s17, 0
    loop: start=0, step=1, limit=4
    $region2: #{tpu_custom_call.1} parent=1 // loop_pre_header
      _
    $region3: #{tpu_custom_call.1} parent=1 // loop_header
      %s20 = sphi 0, %s24
      %p21 = scmp.ge.s32.totalorder %s20, 4
      %s30 = sphi 0, %s32
      %s33 = sphi 0, %s30
      %s34 = sphi 0, %s33
      %s50 = sphi 0, %s34
      %s54 = sphi 0, %s54
      %s56 = sphi 0, %s54
      %s57 = sphi 0, %s56
      %s71 = sphi 0, %s57
      %s75 = sphi 0, %s75
      %s77 = sphi 0, %s75
      %s78 = sphi 0, %s77
      %s92 = sphi 0, %s78
      %s96 = sphi 0, %s96
      %s98 = sphi 0, %s96
      %s99 = sphi 0, %s98
      %s113 = sphi 0, %s99
      %s117 = sphi 0, %s117
      %s119 = sphi 0, %s117
      %s120 = sphi 0, %s119
      %s134 = sphi 0, %s120
      %s138 = sphi 0, %s138
      %s140 = sphi 0, %s138
      %s141 = sphi 0, %s140
      %s155 = sphi 0, %s141
      %s161 = sphi 0, %s163
      %s164 = sphi 0, %s161
      %s165 = sphi 0, %s164
      %s181 = sphi 0, %s165
    $region4: #{tpu_custom_call.1} parent=1 // loop_header_branch
      %23 = sbr.rel (%p21) target = $region8
    $region5: #{tpu_custom_call.1} parent=1 // loop_body
      %s25 = ssub.s32 %s20, 1
      %s26 = ssub.s32 %s20, 2
      %s27 = sadd.s32 %s20, 1
      %s28 = ssub.s32 %s20, %s27
      %p29 = scmp.eq.s32.totalorder %s28, 0
      %s31 = sadd.s32 %s30, 1
      %s32 = scalar_select %p29, %s30, %s31
      %p35 = pneg %p29
      %p36 = scmp.eq.s32.totalorder %s20, 1
      %p37 = por %p35, %p36
      %p38 = scmp.ne.s32.totalorder %s30, %s33
      %p39 = scmp.eq.s32.totalorder %s20, 0
      %p40 = por %p38, %p39
      %p41 = scmp.ne.s32.totalorder %s30, %s33
      %p42 = scmp.eq.s32.totalorder %s25, 1
      %p43 = por %p41, %p42
      %p44 = scmp.ne.s32.totalorder %s33, %s34
      %p45 = scmp.eq.s32.totalorder %s25, 0
      %p46 = por %p44, %p45
      %p47 = scmp.ne.s32.totalorder %s33, %s34
      %p48 = scmp.eq.s32.totalorder %s26, 1
      %p49 = por %p47, %p48
      %p51 = scmp.ne.s32.totalorder %s34, %s50
      %p52 = scmp.eq.s32.totalorder %s26, 0
      %p53 = por %p51, %p52
      %s55 = sadd.s32 %s54, 1
      %p58 = scmp.eq.s32.totalorder %s20, 1
      %p59 = scmp.ne.s32.totalorder %s54, %s56
      %p60 = scmp.eq.s32.totalorder %s20, 0
      %p61 = por %p59, %p60
      %p62 = scmp.ne.s32.totalorder %s54, %s56
      %p63 = scmp.eq.s32.totalorder %s25, 1
      %p64 = por %p62, %p63
      %p65 = scmp.ne.s32.totalorder %s56, %s57
      %p66 = scmp.eq.s32.totalorder %s25, 0
      %p67 = por %p65, %p66
      %p68 = scmp.ne.s32.totalorder %s56, %s57
      %p69 = scmp.eq.s32.totalorder %s26, 1
      %p70 = por %p68, %p69
      %p72 = scmp.ne.s32.totalorder %s57, %s71
      %p73 = scmp.eq.s32.totalorder %s26, 0
      %p74 = por %p72, %p73
      %s76 = sadd.s32 %s75, 1
      %p79 = scmp.eq.s32.totalorder %s20, 1
      %p80 = scmp.ne.s32.totalorder %s75, %s77
      %p81 = scmp.eq.s32.totalorder %s20, 0
      %p82 = por %p80, %p81
      %p83 = scmp.ne.s32.totalorder %s75, %s77
      %p84 = scmp.eq.s32.totalorder %s25, 1
      %p85 = por %p83, %p84
      %p86 = scmp.ne.s32.totalorder %s77, %s78
      %p87 = scmp.eq.s32.totalorder %s25, 0
      %p88 = por %p86, %p87
      %p89 = scmp.ne.s32.totalorder %s77, %s78
      %p90 = scmp.eq.s32.totalorder %s26, 1
      %p91 = por %p89, %p90
      %p93 = scmp.ne.s32.totalorder %s78, %s92
      %p94 = scmp.eq.s32.totalorder %s26, 0
      %p95 = por %p93, %p94
      %s97 = sadd.s32 %s96, 1
      %p100 = scmp.eq.s32.totalorder %s20, 1
      %p101 = scmp.ne.s32.totalorder %s96, %s98
      %p102 = scmp.eq.s32.totalorder %s20, 0
      %p103 = por %p101, %p102
      %p104 = scmp.ne.s32.totalorder %s96, %s98
      %p105 = scmp.eq.s32.totalorder %s25, 1
      %p106 = por %p104, %p105
      %p107 = scmp.ne.s32.totalorder %s98, %s99
      %p108 = scmp.eq.s32.totalorder %s25, 0
      %p109 = por %p107, %p108
      %p110 = scmp.ne.s32.totalorder %s98, %s99
      %p111 = scmp.eq.s32.totalorder %s26, 1
      %p112 = por %p110, %p111
      %p114 = scmp.ne.s32.totalorder %s99, %s113
      %p115 = scmp.eq.s32.totalorder %s26, 0
      %p116 = por %p114, %p115
      %s118 = sadd.s32 %s117, 1
      %p121 = scmp.eq.s32.totalorder %s20, 1
      %p122 = scmp.ne.s32.totalorder %s117, %s119
      %p123 = scmp.eq.s32.totalorder %s20, 0
      %p124 = por %p122, %p123
      %p125 = scmp.ne.s32.totalorder %s117, %s119
      %p126 = scmp.eq.s32.totalorder %s25, 1
      %p127 = por %p125, %p126
      %p128 = scmp.ne.s32.totalorder %s119, %s120
      %p129 = scmp.eq.s32.totalorder %s25, 0
      %p130 = por %p128, %p129
      %p131 = scmp.ne.s32.totalorder %s119, %s120
      %p132 = scmp.eq.s32.totalorder %s26, 1
      %p133 = por %p131, %p132
      %p135 = scmp.ne.s32.totalorder %s120, %s134
      %p136 = scmp.eq.s32.totalorder %s26, 0
      %p137 = por %p135, %p136
      %s139 = sadd.s32 %s138, 1
      %p142 = scmp.eq.s32.totalorder %s20, 1
      %p143 = scmp.ne.s32.totalorder %s138, %s140
      %p144 = scmp.eq.s32.totalorder %s20, 0
      %p145 = por %p143, %p144
      %p146 = scmp.ne.s32.totalorder %s138, %s140
      %p147 = scmp.eq.s32.totalorder %s25, 1
      %p148 = por %p146, %p147
      %p149 = scmp.ne.s32.totalorder %s140, %s141
      %p150 = scmp.eq.s32.totalorder %s25, 0
      %p151 = por %p149, %p150
      %p152 = scmp.ne.s32.totalorder %s140, %s141
      %p153 = scmp.eq.s32.totalorder %s26, 1
      %p154 = por %p152, %p153
      %p156 = scmp.ne.s32.totalorder %s141, %s155
      %p157 = scmp.eq.s32.totalorder %s26, 0
      %p158 = por %p156, %p157
      %s159 = ssub.s32 %s20, %s27
      %p160 = scmp.eq.s32.totalorder %s159, 0
      %s162 = sadd.s32 %s161, 1
      %s163 = scalar_select %p160, %s161, %s162
      %p166 = pneg %p160
      %p167 = scmp.eq.s32.totalorder %s20, 1
      %p168 = por %p166, %p167
      %p169 = scmp.ne.s32.totalorder %s161, %s164
      %p170 = scmp.eq.s32.totalorder %s20, 0
      %p171 = por %p169, %p170
      %p172 = scmp.ne.s32.totalorder %s161, %s164
      %p173 = scmp.eq.s32.totalorder %s25, 1
      %p174 = por %p172, %p173
      %p175 = scmp.ne.s32.totalorder %s164, %s165
      %p176 = scmp.eq.s32.totalorder %s25, 0
      %p177 = por %p175, %p176
      %p178 = scmp.ne.s32.totalorder %s164, %s165
      %p179 = scmp.eq.s32.totalorder %s26, 1
      %p180 = por %p178, %p179
      %p182 = scmp.ne.s32.totalorder %s165, %s181
      %p183 = scmp.eq.s32.totalorder %s26, 0
      %p184 = por %p182, %p183
      %p185 = scmp.le.s32.totalorder 1, %s20
      %p186 = scmp.lt.s32.totalorder %s20, 3
      %p187 = pnand %p185, %p186
      %p188 = pneg %p187
      // Predicated region
      $region9: #{tpu_custom_call.1} parent=5 // pred_check
        _
      $region10: #{tpu_custom_call.1} parent=5 // pred_check_branch
        %190 = sbr.rel (%p187) target = $region12
      $region11: #{tpu_custom_call.1} parent=5 // pred_region
        %s191 = ssub.s32 %s20, 1
        // Predicated region
        $region13: #{tpu_custom_call.1} parent=11 // pred_check
          %p192 = pneg %p67
        $region14: #{tpu_custom_call.1} parent=11 // pred_check_branch
          %194 = sbr.rel (%p192) target = $region16
        $region15: #{tpu_custom_call.1} parent=11 // pred_region
          %s196 = ssub.s32 8192, 8192
          %197 = vsyncadd [#allocation10], %s196
          %s198 = sshll.u32 [#allocation9], 4
          %s199 = int_to_ptr.vmem [resolvable:$true] %s198
          %204 = dma.hbm_to_vmem [thread:$0]  %s1, 8192, %s199, [#allocation10], 512, 512, 32
        $region16: #{tpu_custom_call.1} parent=11 // pred_fallthru
          _
        // Predicated region
        $region17: #{tpu_custom_call.1} parent=11 // pred_check
          %p205 = pneg %p88
        $region18: #{tpu_custom_call.1} parent=11 // pred_check_branch
          %207 = sbr.rel (%p205) target = $region20
        $region19: #{tpu_custom_call.1} parent=11 // pred_region
          %s209 = ssub.s32 8192, 8192
          %210 = vsyncadd [#allocation10], %s209
          %s211 = sshll.u32 [#allocation11], 4
          %s212 = int_to_ptr.vmem [resolvable:$true] %s211
          %217 = dma.hbm_to_vmem [thread:$0]  %s2, 8192, %s212, [#allocation10], 512, 512, 32
        $region20: #{tpu_custom_call.1} parent=11 // pred_fallthru
          _
        // Predicated region
        $region21: #{tpu_custom_call.1} parent=11 // pred_check
          %p218 = pneg %p109
        $region22: #{tpu_custom_call.1} parent=11 // pred_check_branch
          %220 = sbr.rel (%p218) target = $region24
        $region23: #{tpu_custom_call.1} parent=11 // pred_region
          _
        $region24: #{tpu_custom_call.1} parent=11 // pred_fallthru
          _
        // Predicated region
        $region25: #{tpu_custom_call.1} parent=11 // pred_check
          %p221 = pneg %p130
        $region26: #{tpu_custom_call.1} parent=11 // pred_check_branch
          %223 = sbr.rel (%p221) target = $region28
        $region27: #{tpu_custom_call.1} parent=11 // pred_region
          %s225 = ssub.s32 2048, 2048
          %226 = vsyncadd [#allocation13], %s225
          %s227 = sshll.u32 [#allocation12], 4
          %s228 = int_to_ptr.vmem [resolvable:$true] %s227
          %233 = dma.hbm_to_vmem [thread:$0]  %s4, 2048, %s228, [#allocation13], 128, 128, 8
        $region28: #{tpu_custom_call.1} parent=11 // pred_fallthru
          _
        // Predicated region
        $region29: #{tpu_custom_call.1} parent=11 // pred_check
          %p234 = pneg %p151
        $region30: #{tpu_custom_call.1} parent=11 // pred_check_branch
          %236 = sbr.rel (%p234) target = $region32
        $region31: #{tpu_custom_call.1} parent=11 // pred_region
          _
        $region32: #{tpu_custom_call.1} parent=11 // pred_fallthru
          _
      $region12: #{tpu_custom_call.1} parent=5 // pred_fallthru
        _
      %p237 = scmp.lt.s32.totalorder %s20, 2
      // Predicated region
      $region33: #{tpu_custom_call.1} parent=5 // pred_check
        %p238 = pneg %p237
      $region34: #{tpu_custom_call.1} parent=5 // pred_check_branch
        %240 = sbr.rel (%p238) target = $region36
      $region35: #{tpu_custom_call.1} parent=5 // pred_region
        // Predicated region
        $region37: #{tpu_custom_call.1} parent=35 // pred_check
          %p241 = pneg %p40
        $region38: #{tpu_custom_call.1} parent=35 // pred_check_branch
          %243 = sbr.rel (%p241) target = $region40
        $region39: #{tpu_custom_call.1} parent=35 // pred_region
          %s244 = sand.u32 %s30, 1
          %s245 = scalar_lea.sflag [#allocation7], %s244
          %s246 = sand.u32 %s30, 1
          %s247 = smul.addr %s246, 32
          %s248 = scalar_lea.vmem [#allocation6], %s247
          %s249 = smul.u32 4, %s20
          %s251 = ssub.s32 512, 512
          %252 = vsyncadd %s245, %s251
          %s253 = smul.addr %s249, 128
          %s254 = scalar_lea.hbm %s0, %s253
          %s255 = sshll.u32 %s248, 4
          %s256 = int_to_ptr.vmem [resolvable:$true] %s255
          %261 = dma.hbm_to_vmem [thread:$0]  %s254, 512, %s256, %s245, 128, 128, 8
        $region40: #{tpu_custom_call.1} parent=35 // pred_fallthru
          _
      $region36: #{tpu_custom_call.1} parent=5 // pred_fallthru
        _
      %p262 = scmp.le.s32.totalorder 1, %s20
      %p263 = scmp.lt.s32.totalorder %s20, 3
      %p264 = pnand %p262, %p263
      %p265 = pneg %p264
      // Predicated region
      $region41: #{tpu_custom_call.1} parent=5 // pred_check
        _
      $region42: #{tpu_custom_call.1} parent=5 // pred_check_branch
        %267 = sbr.rel (%p264) target = $region44
      $region43: #{tpu_custom_call.1} parent=5 // pred_region
        %s268 = ssub.s32 %s20, 1
        %s269 = sand.u32 %s33, 1
        %s270 = scalar_lea.sflag [#allocation7], %s269
        %s271 = sand.u32 %s33, 1
        %s272 = smul.addr %s271, 32
        %s273 = scalar_lea.vmem [#allocation6], %s272
        // Predicated region
        $region45: #{tpu_custom_call.1} parent=43 // pred_check
          %p274 = pneg %p46
        $region46: #{tpu_custom_call.1} parent=43 // pred_check_branch
          %276 = sbr.rel (%p274) target = $region48
        $region47: #{tpu_custom_call.1} parent=43 // pred_region
          %277 = dma.done %s270, 512
        $region48: #{tpu_custom_call.1} parent=43 // pred_fallthru
          _
        // Predicated region
        $region49: #{tpu_custom_call.1} parent=43 // pred_check
          %p278 = pneg %p67
        $region50: #{tpu_custom_call.1} parent=43 // pred_check_branch
          %280 = sbr.rel (%p278) target = $region52
        $region51: #{tpu_custom_call.1} parent=43 // pred_region
          %281 = dma.done [#allocation10], 8192
        $region52: #{tpu_custom_call.1} parent=43 // pred_fallthru
          _
        // Predicated region
        $region53: #{tpu_custom_call.1} parent=43 // pred_check
          %p282 = pneg %p88
        $region54: #{tpu_custom_call.1} parent=43 // pred_check_branch
          %284 = sbr.rel (%p282) target = $region56
        $region55: #{tpu_custom_call.1} parent=43 // pred_region
          %285 = dma.done [#allocation10], 8192
        $region56: #{tpu_custom_call.1} parent=43 // pred_fallthru
          _
        // Predicated region
        $region57: #{tpu_custom_call.1} parent=43 // pred_check
          %p286 = pneg %p130
        $region58: #{tpu_custom_call.1} parent=43 // pred_check_branch
          %288 = sbr.rel (%p286) target = $region60
        $region59: #{tpu_custom_call.1} parent=43 // pred_region
          %289 = dma.done [#allocation13], 2048
        $region60: #{tpu_custom_call.1} parent=43 // pred_fallthru
          _
        %s290 = sand.u32 %s33, 1
        %s291 = scalar_lea.sflag [#allocation7], %s290
        %s292 = sand.u32 %s33, 1
        %s293 = smul.addr %s292, 32
        %s294 = scalar_lea.vmem [#allocation6], %s293
        %p295 = pneg %p46
        %p296 = pneg %p43
        %p297 = pneg %p67
        %p298 = pneg %p64
        %p299 = pneg %p88
        %p300 = pneg %p85
        %p301 = pneg %p109
        %p302 = pneg %p106
        %p303 = pneg %p130
        %p304 = pneg %p127
        %p305 = pneg %p151
        %p306 = pneg %p148
        %p307 = pneg %p177
        %p308 = pneg %p174
        %s309 = sand.u32 %s164, 1
        %s310 = scalar_lea.sflag [#allocation8], %s309
        %s311 = sand.u32 %s164, 1
        %s312 = smul.addr %s311, 32
        %s313 = scalar_lea.vmem [#allocation14], %s312
        %s314 = smul.u32 4, %s25
        %s315 = smul.u32 4, %s25
        %p316 = scmp.eq.s32.totalorder %s25, 0
        // Predicated region
        $region61: #{tpu_custom_call.1} parent=43 // pred_check
          %p317 = pneg %p316
        $region62: #{tpu_custom_call.1} parent=43 // pred_check_branch
          %319 = sbr.rel (%p317) target = $region64
        $region63: #{tpu_custom_call.1} parent=43 // pred_region
          %320 = vst [vmem:[#allocation2] sm:$0xff] 0.0
          %321 = vst [vmem:[#allocation3] sm:$0xff] 0.0
        $region64: #{tpu_custom_call.1} parent=43 // pred_fallthru
          _
        %v322 = vld [vmem:[%s273] sm:$0xff]
        %v323 = vld [vmem:[%s273 + $0x8] sm:$0xff]
        %v324 = vld [vmem:[%s273 + $0x10] sm:$0xff]
        %v325 = vld [vmem:[%s273 + $0x18] sm:$0xff]
        %v326 = vld [vmem:[#allocation9] sm:$0xff]
        %v327 = vld [vmem:[#allocation9 + $0x8] sm:$0xff]
        %v328 = vld [vmem:[#allocation9 + $0x10] sm:$0xff]
        %v329 = vld [vmem:[#allocation9 + $0x18] sm:$0xff]
        %v330 = vld [vmem:[#allocation9 + $0x20] sm:$0xff]
        %v331 = vld [vmem:[#allocation9 + $0x28] sm:$0xff]
        %v332 = vld [vmem:[#allocation9 + $0x30] sm:$0xff]
        %v333 = vld [vmem:[#allocation9 + $0x38] sm:$0xff]
        %v334 = vld [vmem:[#allocation9 + $0x40] sm:$0xff]
        %v335 = vld [vmem:[#allocation9 + $0x48] sm:$0xff]
        %v336 = vld [vmem:[#allocation9 + $0x50] sm:$0xff]
        %v337 = vld [vmem:[#allocation9 + $0x58] sm:$0xff]
        %v338 = vld [vmem:[#allocation9 + $0x60] sm:$0xff]
        %v339 = vld [vmem:[#allocation9 + $0x68] sm:$0xff]
        %v340 = vld [vmem:[#allocation9 + $0x70] sm:$0xff]
        %v341 = vld [vmem:[#allocation9 + $0x78] sm:$0xff]
        %v342 = vld [vmem:[#allocation9 + $0x80] sm:$0xff]
        %v343 = vld [vmem:[#allocation9 + $0x88] sm:$0xff]
        %v344 = vld [vmem:[#allocation9 + $0x90] sm:$0xff]
        %v345 = vld [vmem:[#allocation9 + $0x98] sm:$0xff]
        %v346 = vld [vmem:[#allocation9 + $0xa0] sm:$0xff]
        %v347 = vld [vmem:[#allocation9 + $0xa8] sm:$0xff]
        %v348 = vld [vmem:[#allocation9 + $0xb0] sm:$0xff]
        %v349 = vld [vmem:[#allocation9 + $0xb8] sm:$0xff]
        %v350 = vld [vmem:[#allocation9 + $0xc0] sm:$0xff]
        %v351 = vld [vmem:[#allocation9 + $0xc8] sm:$0xff]
        %v352 = vld [vmem:[#allocation9 + $0xd0] sm:$0xff]
        %v353 = vld [vmem:[#allocation9 + $0xd8] sm:$0xff]
        %v354 = vld [vmem:[#allocation9 + $0xe0] sm:$0xff]
        %v355 = vld [vmem:[#allocation9 + $0xe8] sm:$0xff]
        %v356 = vld [vmem:[#allocation9 + $0xf0] sm:$0xff]
        %v357 = vld [vmem:[#allocation9 + $0xf8] sm:$0xff]
        %v358 = vld [vmem:[#allocation9 + $0x100] sm:$0xff]
        %v359 = vld [vmem:[#allocation9 + $0x108] sm:$0xff]
        %v360 = vld [vmem:[#allocation9 + $0x110] sm:$0xff]
        %v361 = vld [vmem:[#allocation9 + $0x118] sm:$0xff]
        %v362 = vld [vmem:[#allocation9 + $0x120] sm:$0xff]
        %v363 = vld [vmem:[#allocation9 + $0x128] sm:$0xff]
        %v364 = vld [vmem:[#allocation9 + $0x130] sm:$0xff]
        %v365 = vld [vmem:[#allocation9 + $0x138] sm:$0xff]
        %v366 = vld [vmem:[#allocation9 + $0x140] sm:$0xff]
        %v367 = vld [vmem:[#allocation9 + $0x148] sm:$0xff]
        %v368 = vld [vmem:[#allocation9 + $0x150] sm:$0xff]
        %v369 = vld [vmem:[#allocation9 + $0x158] sm:$0xff]
        %v370 = vld [vmem:[#allocation9 + $0x160] sm:$0xff]
        %v371 = vld [vmem:[#allocation9 + $0x168] sm:$0xff]
        %v372 = vld [vmem:[#allocation9 + $0x170] sm:$0xff]
        %v373 = vld [vmem:[#allocation9 + $0x178] sm:$0xff]
        %v374 = vld [vmem:[#allocation9 + $0x180] sm:$0xff]
        %v375 = vld [vmem:[#allocation9 + $0x188] sm:$0xff]
        %v376 = vld [vmem:[#allocation9 + $0x190] sm:$0xff]
        %v377 = vld [vmem:[#allocation9 + $0x198] sm:$0xff]
        %v378 = vld [vmem:[#allocation9 + $0x1a0] sm:$0xff]
        %v379 = vld [vmem:[#allocation9 + $0x1a8] sm:$0xff]
        %v380 = vld [vmem:[#allocation9 + $0x1b0] sm:$0xff]
        %v381 = vld [vmem:[#allocation9 + $0x1b8] sm:$0xff]
        %v382 = vld [vmem:[#allocation9 + $0x1c0] sm:$0xff]
        %v383 = vld [vmem:[#allocation9 + $0x1c8] sm:$0xff]
        %v384 = vld [vmem:[#allocation9 + $0x1d0] sm:$0xff]
        %v385 = vld [vmem:[#allocation9 + $0x1d8] sm:$0xff]
        %v386 = vld [vmem:[#allocation9 + $0x1e0] sm:$0xff]
        %v387 = vld [vmem:[#allocation9 + $0x1e8] sm:$0xff]
        %v388 = vld [vmem:[#allocation9 + $0x1f0] sm:$0xff]
        %v389 = vld [vmem:[#allocation9 + $0x1f8] sm:$0xff]
        %v390 = vld [vmem:[%s3] sm:$0xf]
        %v392 = vlaneseq
        %v393 = vshrl.u32 %v392, 7
        %v394 = vsub.s32 0, %v393
        %v395 = vrot.slane %v390, %v394
        %v396 = vlaneseq
        %v397 = vshrl.u32 %v396, 7
        %v398 = vsub.s32 1, %v397
        %v399 = vrot.slane %v390, %v398
        %v400 = vlaneseq
        %v401 = vshrl.u32 %v400, 7
        %v402 = vsub.s32 2, %v401
        %v403 = vrot.slane %v390, %v402
        %v404 = vlaneseq
        %v405 = vshrl.u32 %v404, 7
        %v406 = vsub.s32 3, %v405
        %v407 = vrot.slane %v390, %v406
        %412 = vmatprep.subr.mxu0 %v387
        %413 = vmatpush1.msra.mxu0 %v386
        %414 = vmatprep.subr.mxu0 %v383
        %415 = vmatpush1.msra.mxu0 %v382
        %416 = vmatprep.subr.mxu0 %v379
        %417 = vmatpush1.msra.mxu0 %v378
        %418 = vmatprep.subr.mxu0 %v375
        %419 = vmatpush1.msra.mxu0 %v374
        %420 = vmatprep.subr.mxu0 %v371
        %421 = vmatpush1.msra.mxu0 %v370
        %422 = vmatprep.subr.mxu0 %v367
        %423 = vmatpush1.msra.mxu0 %v366
        %424 = vmatprep.subr.mxu0 %v363
        %425 = vmatpush1.msra.mxu0 %v362
        %426 = vmatprep.subr.mxu0 %v359
        %427 = vmatpush1.msra.mxu0 %v358
        %428 = vmatprep.subr.mxu0 %v355
        %429 = vmatpush1.msra.mxu0 %v354
        %430 = vmatprep.subr.mxu0 %v351
        %431 = vmatpush1.msra.mxu0 %v350
        %432 = vmatprep.subr.mxu0 %v347
        %433 = vmatpush1.msra.mxu0 %v346
        %434 = vmatprep.subr.mxu0 %v343
        %435 = vmatpush1.msra.mxu0 %v342
        %436 = vmatprep.subr.mxu0 %v339
        %437 = vmatpush1.msra.mxu0 %v338
        %438 = vmatprep.subr.mxu0 %v335
        %439 = vmatpush1.msra.mxu0 %v334
        %440 = vmatprep.subr.mxu0 %v331
        %441 = vmatpush1.msra.mxu0 %v330
        %442 = vmatprep.subr.mxu0 %v327
        %443 = vmatpush1.msra.mxu0 %v326
        %444 = vmatprep.subr.mxu0 0.0
        %445 = vmatpush2.msra.mxu0 0.0
        %446 = vmatprep.subr.mxu0 0.0
        %447 = vmatpush2.msra.mxu0 0.0
        %448 = vmatprep.subr.mxu0 0.0
        %449 = vmatpush2.msra.mxu0 0.0
        %450 = vmatprep.subr.mxu0 0.0
        %451 = vmatpush2.msra.mxu0 0.0
        %452 = vmatprep.subr.mxu0 0.0
        %453 = vmatpush2.msra.mxu0 0.0
        %454 = vmatprep.subr.mxu0 0.0
        %455 = vmatpush2.msra.mxu0 0.0
        %456 = vmatprep.subr.mxu0 0.0
        %457 = vmatpush2.msra.mxu0 0.0
        %458 = vmatprep.subr.mxu0 0.0
        %459 = vmatpush2.msra.mxu0 0.0
        %460 = vmatprep.subr.mxu0 0.0
        %461 = vmatpush2.msra.mxu0 0.0
        %462 = vmatprep.subr.mxu0 0.0
        %463 = vmatpush2.msra.mxu0 0.0
        %464 = vmatprep.subr.mxu0 0.0
        %465 = vmatpush2.msra.mxu0 0.0
        %466 = vmatprep.subr.mxu0 0.0
        %467 = vmatpush2.msra.mxu0 0.0
        %468 = vmatprep.subr.mxu0 0.0
        %469 = vmatpush2.msra.mxu0 0.0
        %470 = vmatprep.subr.mxu0 0.0
        %471 = vmatpush2.msra.mxu0 0.0
        %472 = vmatprep.subr.mxu0 0.0
        %473 = vmatpush2.msra.mxu0 0.0
        %474 = vmatprep.subr.mxu0 0.0
        %475 = vmatpush2.msra.mxu0 0.0
        %476 = vmatprep.mubr.f32.mxu0 0.0
        %477 = vmatmul.mubr.f32.gmra.mxu0 %v322
        %v478 = vpop.f32.mrf.mxu0
        %v479 = vadd.f32 %v395, %v478
        %v480 = vpop.f32.mrf.mxu0
        %v481 = vadd.f32 %v399, %v480
        %482 = vmatprep.mubr.f32.mxu0 0.0
        %483 = vmatmul.mubr.f32.gmra.mxu0 %v323
        %v484 = vpop.f32.mrf.mxu0
        %v485 = vadd.f32 %v395, %v484
        %v486 = vpop.f32.mrf.mxu0
        %v487 = vadd.f32 %v399, %v486
        %488 = vmatprep.mubr.f32.mxu0 0.0
        %489 = vmatmul.mubr.f32.gmra.mxu0 %v324
        %v490 = vpop.f32.mrf.mxu0
        %v491 = vadd.f32 %v395, %v490
        %v492 = vpop.f32.mrf.mxu0
        %v493 = vadd.f32 %v399, %v492
        %494 = vmatprep.mubr.f32.mxu0 0.0
        %495 = vmatmul.mubr.f32.gmra.mxu0 %v325
        %v496 = vpop.f32.mrf.mxu0
        %v497 = vadd.f32 %v395, %v496
        %v498 = vpop.f32.mrf.mxu0
        %v499 = vadd.f32 %v399, %v498
        %500 = vdwg.mxu0
        %501 = vmatprep.subr.mxu0 %v389
        %502 = vmatpush1.msra.mxu0 %v388
        %503 = vmatprep.subr.mxu0 %v385
        %504 = vmatpush1.msra.mxu0 %v384
        %505 = vmatprep.subr.mxu0 %v381
        %506 = vmatpush1.msra.mxu0 %v380
        %507 = vmatprep.subr.mxu0 %v377
        %508 = vmatpush1.msra.mxu0 %v376
        %509 = vmatprep.subr.mxu0 %v373
        %510 = vmatpush1.msra.mxu0 %v372
        %511 = vmatprep.subr.mxu0 %v369
        %512 = vmatpush1.msra.mxu0 %v368
        %513 = vmatprep.subr.mxu0 %v365
        %514 = vmatpush1.msra.mxu0 %v364
        %515 = vmatprep.subr.mxu0 %v361
        %516 = vmatpush1.msra.mxu0 %v360
        %517 = vmatprep.subr.mxu0 %v357
        %518 = vmatpush1.msra.mxu0 %v356
        %519 = vmatprep.subr.mxu0 %v353
        %520 = vmatpush1.msra.mxu0 %v352
        %521 = vmatprep.subr.mxu0 %v349
        %522 = vmatpush1.msra.mxu0 %v348
        %523 = vmatprep.subr.mxu0 %v345
        %524 = vmatpush1.msra.mxu0 %v344
        %525 = vmatprep.subr.mxu0 %v341
        %526 = vmatpush1.msra.mxu0 %v340
        %527 = vmatprep.subr.mxu0 %v337
        %528 = vmatpush1.msra.mxu0 %v336
        %529 = vmatprep.subr.mxu0 %v333
        %530 = vmatpush1.msra.mxu0 %v332
        %531 = vmatprep.subr.mxu0 %v329
        %532 = vmatpush1.msra.mxu0 %v328
        %533 = vmatprep.subr.mxu0 0.0
        %534 = vmatpush2.msra.mxu0 0.0
        %535 = vmatprep.subr.mxu0 0.0
        %536 = vmatpush2.msra.mxu0 0.0
        %537 = vmatprep.subr.mxu0 0.0
        %538 = vmatpush2.msra.mxu0 0.0
        %539 = vmatprep.subr.mxu0 0.0
        %540 = vmatpush2.msra.mxu0 0.0
        %541 = vmatprep.subr.mxu0 0.0
        %542 = vmatpush2.msra.mxu0 0.0
        %543 = vmatprep.subr.mxu0 0.0
        %544 = vmatpush2.msra.mxu0 0.0
        %545 = vmatprep.subr.mxu0 0.0
        %546 = vmatpush2.msra.mxu0 0.0
        %547 = vmatprep.subr.mxu0 0.0
        %548 = vmatpush2.msra.mxu0 0.0
        %549 = vmatprep.subr.mxu0 0.0
        %550 = vmatpush2.msra.mxu0 0.0
        %551 = vmatprep.subr.mxu0 0.0
        %552 = vmatpush2.msra.mxu0 0.0
        %553 = vmatprep.subr.mxu0 0.0
        %554 = vmatpush2.msra.mxu0 0.0
        %555 = vmatprep.subr.mxu0 0.0
        %556 = vmatpush2.msra.mxu0 0.0
        %557 = vmatprep.subr.mxu0 0.0
        %558 = vmatpush2.msra.mxu0 0.0
        %559 = vmatprep.subr.mxu0 0.0
        %560 = vmatpush2.msra.mxu0 0.0
        %561 = vmatprep.subr.mxu0 0.0
        %562 = vmatpush2.msra.mxu0 0.0
        %563 = vmatprep.subr.mxu0 0.0
        %564 = vmatpush2.msra.mxu0 0.0
        %565 = vmatprep.mubr.f32.mxu0 0.0
        %566 = vmatmul.mubr.f32.gmra.mxu0 %v322
        %v567 = vpop.f32.mrf.mxu0
        %v568 = vadd.f32 %v403, %v567
        %v569 = vpop.f32.mrf.mxu0
        %v570 = vadd.f32 %v407, %v569
        %571 = vmatprep.mubr.f32.mxu0 0.0
        %572 = vmatmul.mubr.f32.gmra.mxu0 %v323
        %v573 = vpop.f32.mrf.mxu0
        %v574 = vadd.f32 %v403, %v573
        %v575 = vpop.f32.mrf.mxu0
        %v576 = vadd.f32 %v407, %v575
        %577 = vmatprep.mubr.f32.mxu0 0.0
        %578 = vmatmul.mubr.f32.gmra.mxu0 %v324
        %v579 = vpop.f32.mrf.mxu0
        %v580 = vadd.f32 %v403, %v579
        %v581 = vpop.f32.mrf.mxu0
        %v582 = vadd.f32 %v407, %v581
        %583 = vmatprep.mubr.f32.mxu0 0.0
        %584 = vmatmul.mubr.f32.gmra.mxu0 %v325
        %v585 = vpop.f32.mrf.mxu0
        %v586 = vadd.f32 %v403, %v585
        %v587 = vpop.f32.mrf.mxu0
        %v588 = vadd.f32 %v407, %v587
        %589 = vdwg.mxu0
        %590 = vst [vmem:[#allocation4] sm:$0xff] %v479
        %591 = vst [vmem:[#allocation4 + $0x8] sm:$0xff] %v481
        %592 = vst [vmem:[#allocation4 + $0x10] sm:$0xff] %v568
        %593 = vst [vmem:[#allocation4 + $0x18] sm:$0xff] %v570
        %594 = vst [vmem:[#allocation4 + $0x20] sm:$0xff] %v485
        %595 = vst [vmem:[#allocation4 + $0x28] sm:$0xff] %v487
        %596 = vst [vmem:[#allocation4 + $0x30] sm:$0xff] %v574
        %597 = vst [vmem:[#allocation4 + $0x38] sm:$0xff] %v576
        %598 = vst [vmem:[#allocation4 + $0x40] sm:$0xff] %v491
        %599 = vst [vmem:[#allocation4 + $0x48] sm:$0xff] %v493
        %600 = vst [vmem:[#allocation4 + $0x50] sm:$0xff] %v580
        %601 = vst [vmem:[#allocation4 + $0x58] sm:$0xff] %v582
        %602 = vst [vmem:[#allocation4 + $0x60] sm:$0xff] %v497
        %603 = vst [vmem:[#allocation4 + $0x68] sm:$0xff] %v499
        %604 = vst [vmem:[#allocation4 + $0x70] sm:$0xff] %v586
        %605 = vst [vmem:[#allocation4 + $0x78] sm:$0xff] %v588
        %v606 = vld [vmem:[#allocation2] sm:$0xff]
        %v607 = vld [vmem:[#allocation3] sm:$0xff]
        %s608 = smul.u32 0, 4
        %s609 = smul.addr %s608, 8
        %s610 = scalar_lea.vmem [#allocation4], %s609
        %v611 = vld [vmem:[%s610] sm:$0xff]
        %v612 = vld [vmem:[%s610 + $0x8] sm:$0xff]
        %v613 = vld [vmem:[%s610 + $0x10] sm:$0xff]
        %v614 = vld [vmem:[%s610 + $0x18] sm:$0xff]
        %v615 = vld [vmem:[#allocation11] sm:$0xff]
        %v616 = vld [vmem:[#allocation11 + $0x8] sm:$0xff]
        %v617 = vld [vmem:[#allocation11 + $0x10] sm:$0xff]
        %v618 = vld [vmem:[#allocation11 + $0x18] sm:$0xff]
        %v619 = vld [vmem:[#allocation11 + $0x20] sm:$0xff]
        %v620 = vld [vmem:[#allocation11 + $0x28] sm:$0xff]
        %v621 = vld [vmem:[#allocation11 + $0x30] sm:$0xff]
        %v622 = vld [vmem:[#allocation11 + $0x38] sm:$0xff]
        %v623 = vld [vmem:[#allocation11 + $0x40] sm:$0xff]
        %v624 = vld [vmem:[#allocation11 + $0x48] sm:$0xff]
        %v625 = vld [vmem:[#allocation11 + $0x50] sm:$0xff]
        %v626 = vld [vmem:[#allocation11 + $0x58] sm:$0xff]
        %v627 = vld [vmem:[#allocation11 + $0x60] sm:$0xff]
        %v628 = vld [vmem:[#allocation11 + $0x68] sm:$0xff]
        %v629 = vld [vmem:[#allocation11 + $0x70] sm:$0xff]
        %v630 = vld [vmem:[#allocation11 + $0x78] sm:$0xff]
        %v631 = vld [vmem:[#allocation11 + $0x80] sm:$0xff]
        %v632 = vld [vmem:[#allocation11 + $0x88] sm:$0xff]
        %v633 = vld [vmem:[#allocation11 + $0x90] sm:$0xff]
        %v634 = vld [vmem:[#allocation11 + $0x98] sm:$0xff]
        %v635 = vld [vmem:[#allocation11 + $0xa0] sm:$0xff]
        %v636 = vld [vmem:[#allocation11 + $0xa8] sm:$0xff]
        %v637 = vld [vmem:[#allocation11 + $0xb0] sm:$0xff]
        %v638 = vld [vmem:[#allocation11 + $0xb8] sm:$0xff]
        %v639 = vld [vmem:[#allocation11 + $0xc0] sm:$0xff]
        %v640 = vld [vmem:[#allocation11 + $0xc8] sm:$0xff]
        %v641 = vld [vmem:[#allocation11 + $0xd0] sm:$0xff]
        %v642 = vld [vmem:[#allocation11 + $0xd8] sm:$0xff]
        %v643 = vld [vmem:[#allocation11 + $0xe0] sm:$0xff]
        %v644 = vld [vmem:[#allocation11 + $0xe8] sm:$0xff]
        %v645 = vld [vmem:[#allocation11 + $0xf0] sm:$0xff]
        %v646 = vld [vmem:[#allocation11 + $0xf8] sm:$0xff]
        %v647 = vld [vmem:[#allocation11 + $0x100] sm:$0xff]
        %v648 = vld [vmem:[#allocation11 + $0x108] sm:$0xff]
        %v649 = vld [vmem:[#allocation11 + $0x110] sm:$0xff]
        %v650 = vld [vmem:[#allocation11 + $0x118] sm:$0xff]
        %v651 = vld [vmem:[#allocation11 + $0x120] sm:$0xff]
        %v652 = vld [vmem:[#allocation11 + $0x128] sm:$0xff]
        %v653 = vld [vmem:[#allocation11 + $0x130] sm:$0xff]
        %v654 = vld [vmem:[#allocation11 + $0x138] sm:$0xff]
        %v655 = vld [vmem:[#allocation11 + $0x140] sm:$0xff]
        %v656 = vld [vmem:[#allocation11 + $0x148] sm:$0xff]
        %v657 = vld [vmem:[#allocation11 + $0x150] sm:$0xff]
        %v658 = vld [vmem:[#allocation11 + $0x158] sm:$0xff]
        %v659 = vld [vmem:[#allocation11 + $0x160] sm:$0xff]
        %v660 = vld [vmem:[#allocation11 + $0x168] sm:$0xff]
        %v661 = vld [vmem:[#allocation11 + $0x170] sm:$0xff]
        %v662 = vld [vmem:[#allocation11 + $0x178] sm:$0xff]
        %v663 = vld [vmem:[#allocation11 + $0x180] sm:$0xff]
        %v664 = vld [vmem:[#allocation11 + $0x188] sm:$0xff]
        %v665 = vld [vmem:[#allocation11 + $0x190] sm:$0xff]
        %v666 = vld [vmem:[#allocation11 + $0x198] sm:$0xff]
        %v667 = vld [vmem:[#allocation11 + $0x1a0] sm:$0xff]
        %v668 = vld [vmem:[#allocation11 + $0x1a8] sm:$0xff]
        %v669 = vld [vmem:[#allocation11 + $0x1b0] sm:$0xff]
        %v670 = vld [vmem:[#allocation11 + $0x1b8] sm:$0xff]
        %v671 = vld [vmem:[#allocation11 + $0x1c0] sm:$0xff]
        %v672 = vld [vmem:[#allocation11 + $0x1c8] sm:$0xff]
        %v673 = vld [vmem:[#allocation11 + $0x1d0] sm:$0xff]
        %v674 = vld [vmem:[#allocation11 + $0x1d8] sm:$0xff]
        %v675 = vld [vmem:[#allocation11 + $0x1e0] sm:$0xff]
        %v676 = vld [vmem:[#allocation11 + $0x1e8] sm:$0xff]
        %v677 = vld [vmem:[#allocation11 + $0x1f0] sm:$0xff]
        %v678 = vld [vmem:[#allocation11 + $0x1f8] sm:$0xff]
        %679 = vmatprep.subr.mxu0 %v676
        %680 = vmatpush1.msra.mxu0 %v675
        %681 = vmatprep.subr.mxu0 %v672
        %682 = vmatpush1.msra.mxu0 %v671
        %683 = vmatprep.subr.mxu0 %v668
        %684 = vmatpush1.msra.mxu0 %v667
        %685 = vmatprep.subr.mxu0 %v664
        %686 = vmatpush1.msra.mxu0 %v663
        %687 = vmatprep.subr.mxu0 %v660
        %688 = vmatpush1.msra.mxu0 %v659
        %689 = vmatprep.subr.mxu0 %v656
        %690 = vmatpush1.msra.mxu0 %v655
        %691 = vmatprep.subr.mxu0 %v652
        %692 = vmatpush1.msra.mxu0 %v651
        %693 = vmatprep.subr.mxu0 %v648
        %694 = vmatpush1.msra.mxu0 %v647
        %695 = vmatprep.subr.mxu0 %v644
        %696 = vmatpush1.msra.mxu0 %v643
        %697 = vmatprep.subr.mxu0 %v640
        %698 = vmatpush1.msra.mxu0 %v639
        %699 = vmatprep.subr.mxu0 %v636
        %700 = vmatpush1.msra.mxu0 %v635
        %701 = vmatprep.subr.mxu0 %v632
        %702 = vmatpush1.msra.mxu0 %v631
        %703 = vmatprep.subr.mxu0 %v628
        %704 = vmatpush1.msra.mxu0 %v627
        %705 = vmatprep.subr.mxu0 %v624
        %706 = vmatpush1.msra.mxu0 %v623
        %707 = vmatprep.subr.mxu0 %v620
        %708 = vmatpush1.msra.mxu0 %v619
        %709 = vmatprep.subr.mxu0 %v616
        %710 = vmatpush1.msra.mxu0 %v615
        %711 = vmatprep.subr.mxu0 0.0
        %712 = vmatpush2.msra.mxu0 0.0
        %713 = vmatprep.subr.mxu0 0.0
        %714 = vmatpush2.msra.mxu0 0.0
        %715 = vmatprep.subr.mxu0 0.0
        %716 = vmatpush2.msra.mxu0 0.0
        %717 = vmatprep.subr.mxu0 0.0
        %718 = vmatpush2.msra.mxu0 0.0
        %719 = vmatprep.subr.mxu0 0.0
        %720 = vmatpush2.msra.mxu0 0.0
        %721 = vmatprep.subr.mxu0 0.0
        %722 = vmatpush2.msra.mxu0 0.0
        %723 = vmatprep.subr.mxu0 0.0
        %724 = vmatpush2.msra.mxu0 0.0
        %725 = vmatprep.subr.mxu0 0.0
        %726 = vmatpush2.msra.mxu0 0.0
        %727 = vmatprep.subr.mxu0 0.0
        %728 = vmatpush2.msra.mxu0 0.0
        %729 = vmatprep.subr.mxu0 0.0
        %730 = vmatpush2.msra.mxu0 0.0
        %731 = vmatprep.subr.mxu0 0.0
        %732 = vmatpush2.msra.mxu0 0.0
        %733 = vmatprep.subr.mxu0 0.0
        %734 = vmatpush2.msra.mxu0 0.0
        %735 = vmatprep.subr.mxu0 0.0
        %736 = vmatpush2.msra.mxu0 0.0
        %737 = vmatprep.subr.mxu0 0.0
        %738 = vmatpush2.msra.mxu0 0.0
        %739 = vmatprep.subr.mxu0 0.0
        %740 = vmatpush2.msra.mxu0 0.0
        %741 = vmatprep.subr.mxu0 0.0
        %742 = vmatpush2.msra.mxu0 0.0
        %743 = vmatprep.mubr.f32.mxu0 0.0
        %744 = vmatmul.mubr.f32.gmra.mxu0 %v606
        %v745 = vpop.f32.mrf.mxu0
        %v746 = vadd.f32 0.0, %v745
        %v747 = vpop.f32.mrf.mxu0
        %v748 = vadd.f32 0.0, %v747
        %749 = vdwg.mxu0
        %750 = vmatprep.subr.mxu0 %v678
        %751 = vmatpush1.msra.mxu0 %v677
        %752 = vmatprep.subr.mxu0 %v674
        %753 = vmatpush1.msra.mxu0 %v673
        %754 = vmatprep.subr.mxu0 %v670
        %755 = vmatpush1.msra.mxu0 %v669
        %756 = vmatprep.subr.mxu0 %v666
        %757 = vmatpush1.msra.mxu0 %v665
        %758 = vmatprep.subr.mxu0 %v662
        %759 = vmatpush1.msra.mxu0 %v661
        %760 = vmatprep.subr.mxu0 %v658
        %761 = vmatpush1.msra.mxu0 %v657
        %762 = vmatprep.subr.mxu0 %v654
        %763 = vmatpush1.msra.mxu0 %v653
        %764 = vmatprep.subr.mxu0 %v650
        %765 = vmatpush1.msra.mxu0 %v649
        %766 = vmatprep.subr.mxu0 %v646
        %767 = vmatpush1.msra.mxu0 %v645
        %768 = vmatprep.subr.mxu0 %v642
        %769 = vmatpush1.msra.mxu0 %v641
        %770 = vmatprep.subr.mxu0 %v638
        %771 = vmatpush1.msra.mxu0 %v637
        %772 = vmatprep.subr.mxu0 %v634
        %773 = vmatpush1.msra.mxu0 %v633
        %774 = vmatprep.subr.mxu0 %v630
        %775 = vmatpush1.msra.mxu0 %v629
        %776 = vmatprep.subr.mxu0 %v626
        %777 = vmatpush1.msra.mxu0 %v625
        %778 = vmatprep.subr.mxu0 %v622
        %779 = vmatpush1.msra.mxu0 %v621
        %780 = vmatprep.subr.mxu0 %v618
        %781 = vmatpush1.msra.mxu0 %v617
        %782 = vmatprep.subr.mxu0 0.0
        %783 = vmatpush2.msra.mxu0 0.0
        %784 = vmatprep.subr.mxu0 0.0
        %785 = vmatpush2.msra.mxu0 0.0
        %786 = vmatprep.subr.mxu0 0.0
        %787 = vmatpush2.msra.mxu0 0.0
        %788 = vmatprep.subr.mxu0 0.0
        %789 = vmatpush2.msra.mxu0 0.0
        %790 = vmatprep.subr.mxu0 0.0
        %791 = vmatpush2.msra.mxu0 0.0
        %792 = vmatprep.subr.mxu0 0.0
        %793 = vmatpush2.msra.mxu0 0.0
        %794 = vmatprep.subr.mxu0 0.0
        %795 = vmatpush2.msra.mxu0 0.0
        %796 = vmatprep.subr.mxu0 0.0
        %797 = vmatpush2.msra.mxu0 0.0
        %798 = vmatprep.subr.mxu0 0.0
        %799 = vmatpush2.msra.mxu0 0.0
        %800 = vmatprep.subr.mxu0 0.0
        %801 = vmatpush2.msra.mxu0 0.0
        %802 = vmatprep.subr.mxu0 0.0
        %803 = vmatpush2.msra.mxu0 0.0
        %804 = vmatprep.subr.mxu0 0.0
        %805 = vmatpush2.msra.mxu0 0.0
        %806 = vmatprep.subr.mxu0 0.0
        %807 = vmatpush2.msra.mxu0 0.0
        %808 = vmatprep.subr.mxu0 0.0
        %809 = vmatpush2.msra.mxu0 0.0
        %810 = vmatprep.subr.mxu0 0.0
        %811 = vmatpush2.msra.mxu0 0.0
        %812 = vmatprep.subr.mxu0 0.0
        %813 = vmatpush2.msra.mxu0 0.0
        %814 = vmatprep.mubr.f32.mxu0 0.0
        %815 = vmatmul.mubr.f32.gmra.mxu0 %v606
        %v816 = vpop.f32.mrf.mxu0
        %v817 = vadd.f32 0.0, %v816
        %v818 = vpop.f32.mrf.mxu0
        %v819 = vadd.f32 0.0, %v818
        %820 = vdwg.mxu0
        %v821 = vadd.f32 %v611, %v746
        %v822 = vadd.f32 %v612, %v748
        %v823 = vadd.f32 %v613, %v817
        %v824 = vadd.f32 %v614, %v819
        %v825 = vmul.f32 %v821, 0.5
        %v826 = vmul.f32 %v822, 0.5
        %v827 = vmul.f32 %v823, 0.5
        %v828 = vtanh.pop %v825
        %v829 = vtanh.pop %v826
        %v830 = vtanh.pop %v827
        %v831 = vmul.f32 %v828, 0.5
        %v832 = vmul.f32 %v829, 0.5
        %v833 = vmul.f32 %v830, 0.5
        %v834 = vadd.f32 %v831, 0.5
        %v835 = vadd.f32 %v832, 0.5
        %v836 = vadd.f32 %v833, 0.5
        %v837 = vtanh.pop %v824
        %v838 = vmul.f32 %v835, %v607
        %v839 = vmul.f32 %v834, %v837
        %v840 = vadd.f32 %v838, %v839
        %v841 = vtanh.pop %v840
        %v842 = vmul.f32 %v836, %v841
        %843 = vst [vmem:[#allocation5] sm:$0xff] %v842
        %s844 = smul.u32 1, 4
        %s845 = smul.addr %s844, 8
        %s846 = scalar_lea.vmem [#allocation4], %s845
        %v847 = vld [vmem:[%s846] sm:$0xff]
        %v848 = vld [vmem:[%s846 + $0x8] sm:$0xff]
        %v849 = vld [vmem:[%s846 + $0x10] sm:$0xff]
        %v850 = vld [vmem:[%s846 + $0x18] sm:$0xff]
        %v851 = vld [vmem:[#allocation11] sm:$0xff]
        %v852 = vld [vmem:[#allocation11 + $0x8] sm:$0xff]
        %v853 = vld [vmem:[#allocation11 + $0x10] sm:$0xff]
        %v854 = vld [vmem:[#allocation11 + $0x18] sm:$0xff]
        %v855 = vld [vmem:[#allocation11 + $0x20] sm:$0xff]
        %v856 = vld [vmem:[#allocation11 + $0x28] sm:$0xff]
        %v857 = vld [vmem:[#allocation11 + $0x30] sm:$0xff]
        %v858 = vld [vmem:[#allocation11 + $0x38] sm:$0xff]
        %v859 = vld [vmem:[#allocation11 + $0x40] sm:$0xff]
        %v860 = vld [vmem:[#allocation11 + $0x48] sm:$0xff]
        %v861 = vld [vmem:[#allocation11 + $0x50] sm:$0xff]
        %v862 = vld [vmem:[#allocation11 + $0x58] sm:$0xff]
        %v863 = vld [vmem:[#allocation11 + $0x60] sm:$0xff]
        %v864 = vld [vmem:[#allocation11 + $0x68] sm:$0xff]
        %v865 = vld [vmem:[#allocation11 + $0x70] sm:$0xff]
        %v866 = vld [vmem:[#allocation11 + $0x78] sm:$0xff]
        %v867 = vld [vmem:[#allocation11 + $0x80] sm:$0xff]
        %v868 = vld [vmem:[#allocation11 + $0x88] sm:$0xff]
        %v869 = vld [vmem:[#allocation11 + $0x90] sm:$0xff]
        %v870 = vld [vmem:[#allocation11 + $0x98] sm:$0xff]
        %v871 = vld [vmem:[#allocation11 + $0xa0] sm:$0xff]
        %v872 = vld [vmem:[#allocation11 + $0xa8] sm:$0xff]
        %v873 = vld [vmem:[#allocation11 + $0xb0] sm:$0xff]
        %v874 = vld [vmem:[#allocation11 + $0xb8] sm:$0xff]
        %v875 = vld [vmem:[#allocation11 + $0xc0] sm:$0xff]
        %v876 = vld [vmem:[#allocation11 + $0xc8] sm:$0xff]
        %v877 = vld [vmem:[#allocation11 + $0xd0] sm:$0xff]
        %v878 = vld [vmem:[#allocation11 + $0xd8] sm:$0xff]
        %v879 = vld [vmem:[#allocation11 + $0xe0] sm:$0xff]
        %v880 = vld [vmem:[#allocation11 + $0xe8] sm:$0xff]
        %v881 = vld [vmem:[#allocation11 + $0xf0] sm:$0xff]
        %v882 = vld [vmem:[#allocation11 + $0xf8] sm:$0xff]
        %v883 = vld [vmem:[#allocation11 + $0x100] sm:$0xff]
        %v884 = vld [vmem:[#allocation11 + $0x108] sm:$0xff]
        %v885 = vld [vmem:[#allocation11 + $0x110] sm:$0xff]
        %v886 = vld [vmem:[#allocation11 + $0x118] sm:$0xff]
        %v887 = vld [vmem:[#allocation11 + $0x120] sm:$0xff]
        %v888 = vld [vmem:[#allocation11 + $0x128] sm:$0xff]
        %v889 = vld [vmem:[#allocation11 + $0x130] sm:$0xff]
        %v890 = vld [vmem:[#allocation11 + $0x138] sm:$0xff]
        %v891 = vld [vmem:[#allocation11 + $0x140] sm:$0xff]
        %v892 = vld [vmem:[#allocation11 + $0x148] sm:$0xff]
        %v893 = vld [vmem:[#allocation11 + $0x150] sm:$0xff]
        %v894 = vld [vmem:[#allocation11 + $0x158] sm:$0xff]
        %v895 = vld [vmem:[#allocation11 + $0x160] sm:$0xff]
        %v896 = vld [vmem:[#allocation11 + $0x168] sm:$0xff]
        %v897 = vld [vmem:[#allocation11 + $0x170] sm:$0xff]
        %v898 = vld [vmem:[#allocation11 + $0x178] sm:$0xff]
        %v899 = vld [vmem:[#allocation11 + $0x180] sm:$0xff]
        %v900 = vld [vmem:[#allocation11 + $0x188] sm:$0xff]
        %v901 = vld [vmem:[#allocation11 + $0x190] sm:$0xff]
        %v902 = vld [vmem:[#allocation11 + $0x198] sm:$0xff]
        %v903 = vld [vmem:[#allocation11 + $0x1a0] sm:$0xff]
        %v904 = vld [vmem:[#allocation11 + $0x1a8] sm:$0xff]
        %v905 = vld [vmem:[#allocation11 + $0x1b0] sm:$0xff]
        %v906 = vld [vmem:[#allocation11 + $0x1b8] sm:$0xff]
        %v907 = vld [vmem:[#allocation11 + $0x1c0] sm:$0xff]
        %v908 = vld [vmem:[#allocation11 + $0x1c8] sm:$0xff]
        %v909 = vld [vmem:[#allocation11 + $0x1d0] sm:$0xff]
        %v910 = vld [vmem:[#allocation11 + $0x1d8] sm:$0xff]
        %v911 = vld [vmem:[#allocation11 + $0x1e0] sm:$0xff]
        %v912 = vld [vmem:[#allocation11 + $0x1e8] sm:$0xff]
        %v913 = vld [vmem:[#allocation11 + $0x1f0] sm:$0xff]
        %v914 = vld [vmem:[#allocation11 + $0x1f8] sm:$0xff]
        %915 = vmatprep.subr.mxu0 %v912
        %916 = vmatpush1.msra.mxu0 %v911
        %917 = vmatprep.subr.mxu0 %v908
        %918 = vmatpush1.msra.mxu0 %v907
        %919 = vmatprep.subr.mxu0 %v904
        %920 = vmatpush1.msra.mxu0 %v903
        %921 = vmatprep.subr.mxu0 %v900
        %922 = vmatpush1.msra.mxu0 %v899
        %923 = vmatprep.subr.mxu0 %v896
        %924 = vmatpush1.msra.mxu0 %v895
        %925 = vmatprep.subr.mxu0 %v892
        %926 = vmatpush1.msra.mxu0 %v891
        %927 = vmatprep.subr.mxu0 %v888
        %928 = vmatpush1.msra.mxu0 %v887
        %929 = vmatprep.subr.mxu0 %v884
        %930 = vmatpush1.msra.mxu0 %v883
        %931 = vmatprep.subr.mxu0 %v880
        %932 = vmatpush1.msra.mxu0 %v879
        %933 = vmatprep.subr.mxu0 %v876
        %934 = vmatpush1.msra.mxu0 %v875
        %935 = vmatprep.subr.mxu0 %v872
        %936 = vmatpush1.msra.mxu0 %v871
        %937 = vmatprep.subr.mxu0 %v868
        %938 = vmatpush1.msra.mxu0 %v867
        %939 = vmatprep.subr.mxu0 %v864
        %940 = vmatpush1.msra.mxu0 %v863
        %941 = vmatprep.subr.mxu0 %v860
        %942 = vmatpush1.msra.mxu0 %v859
        %943 = vmatprep.subr.mxu0 %v856
        %944 = vmatpush1.msra.mxu0 %v855
        %945 = vmatprep.subr.mxu0 %v852
        %946 = vmatpush1.msra.mxu0 %v851
        %947 = vmatprep.subr.mxu0 0.0
        %948 = vmatpush2.msra.mxu0 0.0
        %949 = vmatprep.subr.mxu0 0.0
        %950 = vmatpush2.msra.mxu0 0.0
        %951 = vmatprep.subr.mxu0 0.0
        %952 = vmatpush2.msra.mxu0 0.0
        %953 = vmatprep.subr.mxu0 0.0
        %954 = vmatpush2.msra.mxu0 0.0
        %955 = vmatprep.subr.mxu0 0.0
        %956 = vmatpush2.msra.mxu0 0.0
        %957 = vmatprep.subr.mxu0 0.0
        %958 = vmatpush2.msra.mxu0 0.0
        %959 = vmatprep.subr.mxu0 0.0
        %960 = vmatpush2.msra.mxu0 0.0
        %961 = vmatprep.subr.mxu0 0.0
        %962 = vmatpush2.msra.mxu0 0.0
        %963 = vmatprep.subr.mxu0 0.0
        %964 = vmatpush2.msra.mxu0 0.0
        %965 = vmatprep.subr.mxu0 0.0
        %966 = vmatpush2.msra.mxu0 0.0
        %967 = vmatprep.subr.mxu0 0.0
        %968 = vmatpush2.msra.mxu0 0.0
        %969 = vmatprep.subr.mxu0 0.0
        %970 = vmatpush2.msra.mxu0 0.0
        %971 = vmatprep.subr.mxu0 0.0
        %972 = vmatpush2.msra.mxu0 0.0
        %973 = vmatprep.subr.mxu0 0.0
        %974 = vmatpush2.msra.mxu0 0.0
        %975 = vmatprep.subr.mxu0 0.0
        %976 = vmatpush2.msra.mxu0 0.0
        %977 = vmatprep.subr.mxu0 0.0
        %978 = vmatpush2.msra.mxu0 0.0
        %979 = vmatprep.mubr.f32.mxu0 0.0
        %980 = vmatmul.mubr.f32.gmra.mxu0 %v842
        %v981 = vpop.f32.mrf.mxu0
        %v982 = vadd.f32 0.0, %v981
        %v983 = vpop.f32.mrf.mxu0
        %v984 = vadd.f32 0.0, %v983
        %985 = vdwg.mxu0
        %986 = vmatprep.subr.mxu0 %v914
        %987 = vmatpush1.msra.mxu0 %v913
        %988 = vmatprep.subr.mxu0 %v910
        %989 = vmatpush1.msra.mxu0 %v909
        %990 = vmatprep.subr.mxu0 %v906
        %991 = vmatpush1.msra.mxu0 %v905
        %992 = vmatprep.subr.mxu0 %v902
        %993 = vmatpush1.msra.mxu0 %v901
        %994 = vmatprep.subr.mxu0 %v898
        %995 = vmatpush1.msra.mxu0 %v897
        %996 = vmatprep.subr.mxu0 %v894
        %997 = vmatpush1.msra.mxu0 %v893
        %998 = vmatprep.subr.mxu0 %v890
        %999 = vmatpush1.msra.mxu0 %v889
        %1000 = vmatprep.subr.mxu0 %v886
        %1001 = vmatpush1.msra.mxu0 %v885
        %1002 = vmatprep.subr.mxu0 %v882
        %1003 = vmatpush1.msra.mxu0 %v881
        %1004 = vmatprep.subr.mxu0 %v878
        %1005 = vmatpush1.msra.mxu0 %v877
        %1006 = vmatprep.subr.mxu0 %v874
        %1007 = vmatpush1.msra.mxu0 %v873
        %1008 = vmatprep.subr.mxu0 %v870
        %1009 = vmatpush1.msra.mxu0 %v869
        %1010 = vmatprep.subr.mxu0 %v866
        %1011 = vmatpush1.msra.mxu0 %v865
        %1012 = vmatprep.subr.mxu0 %v862
        %1013 = vmatpush1.msra.mxu0 %v861
        %1014 = vmatprep.subr.mxu0 %v858
        %1015 = vmatpush1.msra.mxu0 %v857
        %1016 = vmatprep.subr.mxu0 %v854
        %1017 = vmatpush1.msra.mxu0 %v853
        %1018 = vmatprep.subr.mxu0 0.0
        %1019 = vmatpush2.msra.mxu0 0.0
        %1020 = vmatprep.subr.mxu0 0.0
        %1021 = vmatpush2.msra.mxu0 0.0
        %1022 = vmatprep.subr.mxu0 0.0
        %1023 = vmatpush2.msra.mxu0 0.0
        %1024 = vmatprep.subr.mxu0 0.0
        %1025 = vmatpush2.msra.mxu0 0.0
        %1026 = vmatprep.subr.mxu0 0.0
        %1027 = vmatpush2.msra.mxu0 0.0
        %1028 = vmatprep.subr.mxu0 0.0
        %1029 = vmatpush2.msra.mxu0 0.0
        %1030 = vmatprep.subr.mxu0 0.0
        %1031 = vmatpush2.msra.mxu0 0.0
        %1032 = vmatprep.subr.mxu0 0.0
        %1033 = vmatpush2.msra.mxu0 0.0
        %1034 = vmatprep.subr.mxu0 0.0
        %1035 = vmatpush2.msra.mxu0 0.0
        %1036 = vmatprep.subr.mxu0 0.0
        %1037 = vmatpush2.msra.mxu0 0.0
        %1038 = vmatprep.subr.mxu0 0.0
        %1039 = vmatpush2.msra.mxu0 0.0
        %1040 = vmatprep.subr.mxu0 0.0
        %1041 = vmatpush2.msra.mxu0 0.0
        %1042 = vmatprep.subr.mxu0 0.0
        %1043 = vmatpush2.msra.mxu0 0.0
        %1044 = vmatprep.subr.mxu0 0.0
        %1045 = vmatpush2.msra.mxu0 0.0
        %1046 = vmatprep.subr.mxu0 0.0
        %1047 = vmatpush2.msra.mxu0 0.0
        %1048 = vmatprep.subr.mxu0 0.0
        %1049 = vmatpush2.msra.mxu0 0.0
        %1050 = vmatprep.mubr.f32.mxu0 0.0
        %1051 = vmatmul.mubr.f32.gmra.mxu0 %v842
        %v1052 = vpop.f32.mrf.mxu0
        %v1053 = vadd.f32 0.0, %v1052
        %v1054 = vpop.f32.mrf.mxu0
        %v1055 = vadd.f32 0.0, %v1054
        %1056 = vdwg.mxu0
        %v1057 = vadd.f32 %v847, %v982
        %v1058 = vadd.f32 %v848, %v984
        %v1059 = vadd.f32 %v849, %v1053
        %v1060 = vadd.f32 %v850, %v1055
        %v1061 = vmul.f32 %v1057, 0.5
        %v1062 = vmul.f32 %v1058, 0.5
        %v1063 = vmul.f32 %v1059, 0.5
        %v1064 = vtanh.pop %v1061
        %v1065 = vtanh.pop %v1062
        %v1066 = vtanh.pop %v1063
        %v1067 = vmul.f32 %v1064, 0.5
        %v1068 = vmul.f32 %v1065, 0.5
        %v1069 = vmul.f32 %v1066, 0.5
        %v1070 = vadd.f32 %v1067, 0.5
        %v1071 = vadd.f32 %v1068, 0.5
        %v1072 = vadd.f32 %v1069, 0.5
        %v1073 = vtanh.pop %v1060
        %v1074 = vmul.f32 %v1071, %v840
        %v1075 = vmul.f32 %v1070, %v1073
        %v1076 = vadd.f32 %v1074, %v1075
        %v1077 = vtanh.pop %v1076
        %v1078 = vmul.f32 %v1072, %v1077
        %s1079 = scalar_lea.vmem [#allocation5], 8
        %1080 = vst [vmem:[%s1079] sm:$0xff] %v1078
        %s1081 = smul.u32 2, 4
        %s1082 = smul.addr %s1081, 8
        %s1083 = scalar_lea.vmem [#allocation4], %s1082
        %v1084 = vld [vmem:[%s1083] sm:$0xff]
        %v1085 = vld [vmem:[%s1083 + $0x8] sm:$0xff]
        %v1086 = vld [vmem:[%s1083 + $0x10] sm:$0xff]
        %v1087 = vld [vmem:[%s1083 + $0x18] sm:$0xff]
        %v1088 = vld [vmem:[#allocation11] sm:$0xff]
        %v1089 = vld [vmem:[#allocation11 + $0x8] sm:$0xff]
        %v1090 = vld [vmem:[#allocation11 + $0x10] sm:$0xff]
        %v1091 = vld [vmem:[#allocation11 + $0x18] sm:$0xff]
        %v1092 = vld [vmem:[#allocation11 + $0x20] sm:$0xff]
        %v1093 = vld [vmem:[#allocation11 + $0x28] sm:$0xff]
        %v1094 = vld [vmem:[#allocation11 + $0x30] sm:$0xff]
        %v1095 = vld [vmem:[#allocation11 + $0x38] sm:$0xff]
        %v1096 = vld [vmem:[#allocation11 + $0x40] sm:$0xff]
        %v1097 = vld [vmem:[#allocation11 + $0x48] sm:$0xff]
        %v1098 = vld [vmem:[#allocation11 + $0x50] sm:$0xff]
        %v1099 = vld [vmem:[#allocation11 + $0x58] sm:$0xff]
        %v1100 = vld [vmem:[#allocation11 + $0x60] sm:$0xff]
        %v1101 = vld [vmem:[#allocation11 + $0x68] sm:$0xff]
        %v1102 = vld [vmem:[#allocation11 + $0x70] sm:$0xff]
        %v1103 = vld [vmem:[#allocation11 + $0x78] sm:$0xff]
        %v1104 = vld [vmem:[#allocation11 + $0x80] sm:$0xff]
        %v1105 = vld [vmem:[#allocation11 + $0x88] sm:$0xff]
        %v1106 = vld [vmem:[#allocation11 + $0x90] sm:$0xff]
        %v1107 = vld [vmem:[#allocation11 + $0x98] sm:$0xff]
        %v1108 = vld [vmem:[#allocation11 + $0xa0] sm:$0xff]
        %v1109 = vld [vmem:[#allocation11 + $0xa8] sm:$0xff]
        %v1110 = vld [vmem:[#allocation11 + $0xb0] sm:$0xff]
        %v1111 = vld [vmem:[#allocation11 + $0xb8] sm:$0xff]
        %v1112 = vld [vmem:[#allocation11 + $0xc0] sm:$0xff]
        %v1113 = vld [vmem:[#allocation11 + $0xc8] sm:$0xff]
        %v1114 = vld [vmem:[#allocation11 + $0xd0] sm:$0xff]
        %v1115 = vld [vmem:[#allocation11 + $0xd8] sm:$0xff]
        %v1116 = vld [vmem:[#allocation11 + $0xe0] sm:$0xff]
        %v1117 = vld [vmem:[#allocation11 + $0xe8] sm:$0xff]
        %v1118 = vld [vmem:[#allocation11 + $0xf0] sm:$0xff]
        %v1119 = vld [vmem:[#allocation11 + $0xf8] sm:$0xff]
        %v1120 = vld [vmem:[#allocation11 + $0x100] sm:$0xff]
        %v1121 = vld [vmem:[#allocation11 + $0x108] sm:$0xff]
        %v1122 = vld [vmem:[#allocation11 + $0x110] sm:$0xff]
        %v1123 = vld [vmem:[#allocation11 + $0x118] sm:$0xff]
        %v1124 = vld [vmem:[#allocation11 + $0x120] sm:$0xff]
        %v1125 = vld [vmem:[#allocation11 + $0x128] sm:$0xff]
        %v1126 = vld [vmem:[#allocation11 + $0x130] sm:$0xff]
        %v1127 = vld [vmem:[#allocation11 + $0x138] sm:$0xff]
        %v1128 = vld [vmem:[#allocation11 + $0x140] sm:$0xff]
        %v1129 = vld [vmem:[#allocation11 + $0x148] sm:$0xff]
        %v1130 = vld [vmem:[#allocation11 + $0x150] sm:$0xff]
        %v1131 = vld [vmem:[#allocation11 + $0x158] sm:$0xff]
        %v1132 = vld [vmem:[#allocation11 + $0x160] sm:$0xff]
        %v1133 = vld [vmem:[#allocation11 + $0x168] sm:$0xff]
        %v1134 = vld [vmem:[#allocation11 + $0x170] sm:$0xff]
        %v1135 = vld [vmem:[#allocation11 + $0x178] sm:$0xff]
        %v1136 = vld [vmem:[#allocation11 + $0x180] sm:$0xff]
        %v1137 = vld [vmem:[#allocation11 + $0x188] sm:$0xff]
        %v1138 = vld [vmem:[#allocation11 + $0x190] sm:$0xff]
        %v1139 = vld [vmem:[#allocation11 + $0x198] sm:$0xff]
        %v1140 = vld [vmem:[#allocation11 + $0x1a0] sm:$0xff]
        %v1141 = vld [vmem:[#allocation11 + $0x1a8] sm:$0xff]
        %v1142 = vld [vmem:[#allocation11 + $0x1b0] sm:$0xff]
        %v1143 = vld [vmem:[#allocation11 + $0x1b8] sm:$0xff]
        %v1144 = vld [vmem:[#allocation11 + $0x1c0] sm:$0xff]
        %v1145 = vld [vmem:[#allocation11 + $0x1c8] sm:$0xff]
        %v1146 = vld [vmem:[#allocation11 + $0x1d0] sm:$0xff]
        %v1147 = vld [vmem:[#allocation11 + $0x1d8] sm:$0xff]
        %v1148 = vld [vmem:[#allocation11 + $0x1e0] sm:$0xff]
        %v1149 = vld [vmem:[#allocation11 + $0x1e8] sm:$0xff]
        %v1150 = vld [vmem:[#allocation11 + $0x1f0] sm:$0xff]
        %v1151 = vld [vmem:[#allocation11 + $0x1f8] sm:$0xff]
        %1152 = vmatprep.subr.mxu0 %v1149
        %1153 = vmatpush1.msra.mxu0 %v1148
        %1154 = vmatprep.subr.mxu0 %v1145
        %1155 = vmatpush1.msra.mxu0 %v1144
        %1156 = vmatprep.subr.mxu0 %v1141
        %1157 = vmatpush1.msra.mxu0 %v1140
        %1158 = vmatprep.subr.mxu0 %v1137
        %1159 = vmatpush1.msra.mxu0 %v1136
        %1160 = vmatprep.subr.mxu0 %v1133
        %1161 = vmatpush1.msra.mxu0 %v1132
        %1162 = vmatprep.subr.mxu0 %v1129
        %1163 = vmatpush1.msra.mxu0 %v1128
        %1164 = vmatprep.subr.mxu0 %v1125
        %1165 = vmatpush1.msra.mxu0 %v1124
        %1166 = vmatprep.subr.mxu0 %v1121
        %1167 = vmatpush1.msra.mxu0 %v1120
        %1168 = vmatprep.subr.mxu0 %v1117
        %1169 = vmatpush1.msra.mxu0 %v1116
        %1170 = vmatprep.subr.mxu0 %v1113
        %1171 = vmatpush1.msra.mxu0 %v1112
        %1172 = vmatprep.subr.mxu0 %v1109
        %1173 = vmatpush1.msra.mxu0 %v1108
        %1174 = vmatprep.subr.mxu0 %v1105
        %1175 = vmatpush1.msra.mxu0 %v1104
        %1176 = vmatprep.subr.mxu0 %v1101
        %1177 = vmatpush1.msra.mxu0 %v1100
        %1178 = vmatprep.subr.mxu0 %v1097
        %1179 = vmatpush1.msra.mxu0 %v1096
        %1180 = vmatprep.subr.mxu0 %v1093
        %1181 = vmatpush1.msra.mxu0 %v1092
        %1182 = vmatprep.subr.mxu0 %v1089
        %1183 = vmatpush1.msra.mxu0 %v1088
        %1184 = vmatprep.subr.mxu0 0.0
        %1185 = vmatpush2.msra.mxu0 0.0
        %1186 = vmatprep.subr.mxu0 0.0
        %1187 = vmatpush2.msra.mxu0 0.0
        %1188 = vmatprep.subr.mxu0 0.0
        %1189 = vmatpush2.msra.mxu0 0.0
        %1190 = vmatprep.subr.mxu0 0.0
        %1191 = vmatpush2.msra.mxu0 0.0
        %1192 = vmatprep.subr.mxu0 0.0
        %1193 = vmatpush2.msra.mxu0 0.0
        %1194 = vmatprep.subr.mxu0 0.0
        %1195 = vmatpush2.msra.mxu0 0.0
        %1196 = vmatprep.subr.mxu0 0.0
        %1197 = vmatpush2.msra.mxu0 0.0
        %1198 = vmatprep.subr.mxu0 0.0
        %1199 = vmatpush2.msra.mxu0 0.0
        %1200 = vmatprep.subr.mxu0 0.0
        %1201 = vmatpush2.msra.mxu0 0.0
        %1202 = vmatprep.subr.mxu0 0.0
        %1203 = vmatpush2.msra.mxu0 0.0
        %1204 = vmatprep.subr.mxu0 0.0
        %1205 = vmatpush2.msra.mxu0 0.0
        %1206 = vmatprep.subr.mxu0 0.0
        %1207 = vmatpush2.msra.mxu0 0.0
        %1208 = vmatprep.subr.mxu0 0.0
        %1209 = vmatpush2.msra.mxu0 0.0
        %1210 = vmatprep.subr.mxu0 0.0
        %1211 = vmatpush2.msra.mxu0 0.0
        %1212 = vmatprep.subr.mxu0 0.0
        %1213 = vmatpush2.msra.mxu0 0.0
        %1214 = vmatprep.subr.mxu0 0.0
        %1215 = vmatpush2.msra.mxu0 0.0
        %1216 = vmatprep.mubr.f32.mxu0 0.0
        %1217 = vmatmul.mubr.f32.gmra.mxu0 %v1078
        %v1218 = vpop.f32.mrf.mxu0
        %v1219 = vadd.f32 0.0, %v1218
        %v1220 = vpop.f32.mrf.mxu0
        %v1221 = vadd.f32 0.0, %v1220
        %1222 = vdwg.mxu0
        %1223 = vmatprep.subr.mxu0 %v1151
        %1224 = vmatpush1.msra.mxu0 %v1150
        %1225 = vmatprep.subr.mxu0 %v1147
        %1226 = vmatpush1.msra.mxu0 %v1146
        %1227 = vmatprep.subr.mxu0 %v1143
        %1228 = vmatpush1.msra.mxu0 %v1142
        %1229 = vmatprep.subr.mxu0 %v1139
        %1230 = vmatpush1.msra.mxu0 %v1138
        %1231 = vmatprep.subr.mxu0 %v1135
        %1232 = vmatpush1.msra.mxu0 %v1134
        %1233 = vmatprep.subr.mxu0 %v1131
        %1234 = vmatpush1.msra.mxu0 %v1130
        %1235 = vmatprep.subr.mxu0 %v1127
        %1236 = vmatpush1.msra.mxu0 %v1126
        %1237 = vmatprep.subr.mxu0 %v1123
        %1238 = vmatpush1.msra.mxu0 %v1122
        %1239 = vmatprep.subr.mxu0 %v1119
        %1240 = vmatpush1.msra.mxu0 %v1118
        %1241 = vmatprep.subr.mxu0 %v1115
        %1242 = vmatpush1.msra.mxu0 %v1114
        %1243 = vmatprep.subr.mxu0 %v1111
        %1244 = vmatpush1.msra.mxu0 %v1110
        %1245 = vmatprep.subr.mxu0 %v1107
        %1246 = vmatpush1.msra.mxu0 %v1106
        %1247 = vmatprep.subr.mxu0 %v1103
        %1248 = vmatpush1.msra.mxu0 %v1102
        %1249 = vmatprep.subr.mxu0 %v1099
        %1250 = vmatpush1.msra.mxu0 %v1098
        %1251 = vmatprep.subr.mxu0 %v1095
        %1252 = vmatpush1.msra.mxu0 %v1094
        %1253 = vmatprep.subr.mxu0 %v1091
        %1254 = vmatpush1.msra.mxu0 %v1090
        %1255 = vmatprep.subr.mxu0 0.0
        %1256 = vmatpush2.msra.mxu0 0.0
        %1257 = vmatprep.subr.mxu0 0.0
        %1258 = vmatpush2.msra.mxu0 0.0
        %1259 = vmatprep.subr.mxu0 0.0
        %1260 = vmatpush2.msra.mxu0 0.0
        %1261 = vmatprep.subr.mxu0 0.0
        %1262 = vmatpush2.msra.mxu0 0.0
        %1263 = vmatprep.subr.mxu0 0.0
        %1264 = vmatpush2.msra.mxu0 0.0
        %1265 = vmatprep.subr.mxu0 0.0
        %1266 = vmatpush2.msra.mxu0 0.0
        %1267 = vmatprep.subr.mxu0 0.0
        %1268 = vmatpush2.msra.mxu0 0.0
        %1269 = vmatprep.subr.mxu0 0.0
        %1270 = vmatpush2.msra.mxu0 0.0
        %1271 = vmatprep.subr.mxu0 0.0
        %1272 = vmatpush2.msra.mxu0 0.0
        %1273 = vmatprep.subr.mxu0 0.0
        %1274 = vmatpush2.msra.mxu0 0.0
        %1275 = vmatprep.subr.mxu0 0.0
        %1276 = vmatpush2.msra.mxu0 0.0
        %1277 = vmatprep.subr.mxu0 0.0
        %1278 = vmatpush2.msra.mxu0 0.0
        %1279 = vmatprep.subr.mxu0 0.0
        %1280 = vmatpush2.msra.mxu0 0.0
        %1281 = vmatprep.subr.mxu0 0.0
        %1282 = vmatpush2.msra.mxu0 0.0
        %1283 = vmatprep.subr.mxu0 0.0
        %1284 = vmatpush2.msra.mxu0 0.0
        %1285 = vmatprep.subr.mxu0 0.0
        %1286 = vmatpush2.msra.mxu0 0.0
        %1287 = vmatprep.mubr.f32.mxu0 0.0
        %1288 = vmatmul.mubr.f32.gmra.mxu0 %v1078
        %v1289 = vpop.f32.mrf.mxu0
        %v1290 = vadd.f32 0.0, %v1289
        %v1291 = vpop.f32.mrf.mxu0
        %v1292 = vadd.f32 0.0, %v1291
        %1293 = vdwg.mxu0
        %v1294 = vadd.f32 %v1084, %v1219
        %v1295 = vadd.f32 %v1085, %v1221
        %v1296 = vadd.f32 %v1086, %v1290
        %v1297 = vadd.f32 %v1087, %v1292
        %v1298 = vmul.f32 %v1294, 0.5
        %v1299 = vmul.f32 %v1295, 0.5
        %v1300 = vmul.f32 %v1296, 0.5
        %v1301 = vtanh.pop %v1298
        %v1302 = vtanh.pop %v1299
        %v1303 = vtanh.pop %v1300
        %v1304 = vmul.f32 %v1301, 0.5
        %v1305 = vmul.f32 %v1302, 0.5
        %v1306 = vmul.f32 %v1303, 0.5
        %v1307 = vadd.f32 %v1304, 0.5
        %v1308 = vadd.f32 %v1305, 0.5
        %v1309 = vadd.f32 %v1306, 0.5
        %v1310 = vtanh.pop %v1297
        %v1311 = vmul.f32 %v1308, %v1076
        %v1312 = vmul.f32 %v1307, %v1310
        %v1313 = vadd.f32 %v1311, %v1312
        %v1314 = vtanh.pop %v1313
        %v1315 = vmul.f32 %v1309, %v1314
        %s1316 = scalar_lea.vmem [#allocation5], 16
        %1317 = vst [vmem:[%s1316] sm:$0xff] %v1315
        %s1318 = smul.u32 3, 4
        %s1319 = smul.addr %s1318, 8
        %s1320 = scalar_lea.vmem [#allocation4], %s1319
        %v1321 = vld [vmem:[%s1320] sm:$0xff]
        %v1322 = vld [vmem:[%s1320 + $0x8] sm:$0xff]
        %v1323 = vld [vmem:[%s1320 + $0x10] sm:$0xff]
        %v1324 = vld [vmem:[%s1320 + $0x18] sm:$0xff]
        %v1325 = vld [vmem:[#allocation11] sm:$0xff]
        %v1326 = vld [vmem:[#allocation11 + $0x8] sm:$0xff]
        %v1327 = vld [vmem:[#allocation11 + $0x10] sm:$0xff]
        %v1328 = vld [vmem:[#allocation11 + $0x18] sm:$0xff]
        %v1329 = vld [vmem:[#allocation11 + $0x20] sm:$0xff]
        %v1330 = vld [vmem:[#allocation11 + $0x28] sm:$0xff]
        %v1331 = vld [vmem:[#allocation11 + $0x30] sm:$0xff]
        %v1332 = vld [vmem:[#allocation11 + $0x38] sm:$0xff]
        %v1333 = vld [vmem:[#allocation11 + $0x40] sm:$0xff]
        %v1334 = vld [vmem:[#allocation11 + $0x48] sm:$0xff]
        %v1335 = vld [vmem:[#allocation11 + $0x50] sm:$0xff]
        %v1336 = vld [vmem:[#allocation11 + $0x58] sm:$0xff]
        %v1337 = vld [vmem:[#allocation11 + $0x60] sm:$0xff]
        %v1338 = vld [vmem:[#allocation11 + $0x68] sm:$0xff]
        %v1339 = vld [vmem:[#allocation11 + $0x70] sm:$0xff]
        %v1340 = vld [vmem:[#allocation11 + $0x78] sm:$0xff]
        %v1341 = vld [vmem:[#allocation11 + $0x80] sm:$0xff]
        %v1342 = vld [vmem:[#allocation11 + $0x88] sm:$0xff]
        %v1343 = vld [vmem:[#allocation11 + $0x90] sm:$0xff]
        %v1344 = vld [vmem:[#allocation11 + $0x98] sm:$0xff]
        %v1345 = vld [vmem:[#allocation11 + $0xa0] sm:$0xff]
        %v1346 = vld [vmem:[#allocation11 + $0xa8] sm:$0xff]
        %v1347 = vld [vmem:[#allocation11 + $0xb0] sm:$0xff]
        %v1348 = vld [vmem:[#allocation11 + $0xb8] sm:$0xff]
        %v1349 = vld [vmem:[#allocation11 + $0xc0] sm:$0xff]
        %v1350 = vld [vmem:[#allocation11 + $0xc8] sm:$0xff]
        %v1351 = vld [vmem:[#allocation11 + $0xd0] sm:$0xff]
        %v1352 = vld [vmem:[#allocation11 + $0xd8] sm:$0xff]
        %v1353 = vld [vmem:[#allocation11 + $0xe0] sm:$0xff]
        %v1354 = vld [vmem:[#allocation11 + $0xe8] sm:$0xff]
        %v1355 = vld [vmem:[#allocation11 + $0xf0] sm:$0xff]
        %v1356 = vld [vmem:[#allocation11 + $0xf8] sm:$0xff]
        %v1357 = vld [vmem:[#allocation11 + $0x100] sm:$0xff]
        %v1358 = vld [vmem:[#allocation11 + $0x108] sm:$0xff]
        %v1359 = vld [vmem:[#allocation11 + $0x110] sm:$0xff]
        %v1360 = vld [vmem:[#allocation11 + $0x118] sm:$0xff]
        %v1361 = vld [vmem:[#allocation11 + $0x120] sm:$0xff]
        %v1362 = vld [vmem:[#allocation11 + $0x128] sm:$0xff]
        %v1363 = vld [vmem:[#allocation11 + $0x130] sm:$0xff]
        %v1364 = vld [vmem:[#allocation11 + $0x138] sm:$0xff]
        %v1365 = vld [vmem:[#allocation11 + $0x140] sm:$0xff]
        %v1366 = vld [vmem:[#allocation11 + $0x148] sm:$0xff]
        %v1367 = vld [vmem:[#allocation11 + $0x150] sm:$0xff]
        %v1368 = vld [vmem:[#allocation11 + $0x158] sm:$0xff]
        %v1369 = vld [vmem:[#allocation11 + $0x160] sm:$0xff]
        %v1370 = vld [vmem:[#allocation11 + $0x168] sm:$0xff]
        %v1371 = vld [vmem:[#allocation11 + $0x170] sm:$0xff]
        %v1372 = vld [vmem:[#allocation11 + $0x178] sm:$0xff]
        %v1373 = vld [vmem:[#allocation11 + $0x180] sm:$0xff]
        %v1374 = vld [vmem:[#allocation11 + $0x188] sm:$0xff]
        %v1375 = vld [vmem:[#allocation11 + $0x190] sm:$0xff]
        %v1376 = vld [vmem:[#allocation11 + $0x198] sm:$0xff]
        %v1377 = vld [vmem:[#allocation11 + $0x1a0] sm:$0xff]
        %v1378 = vld [vmem:[#allocation11 + $0x1a8] sm:$0xff]
        %v1379 = vld [vmem:[#allocation11 + $0x1b0] sm:$0xff]
        %v1380 = vld [vmem:[#allocation11 + $0x1b8] sm:$0xff]
        %v1381 = vld [vmem:[#allocation11 + $0x1c0] sm:$0xff]
        %v1382 = vld [vmem:[#allocation11 + $0x1c8] sm:$0xff]
        %v1383 = vld [vmem:[#allocation11 + $0x1d0] sm:$0xff]
        %v1384 = vld [vmem:[#allocation11 + $0x1d8] sm:$0xff]
        %v1385 = vld [vmem:[#allocation11 + $0x1e0] sm:$0xff]
        %v1386 = vld [vmem:[#allocation11 + $0x1e8] sm:$0xff]
        %v1387 = vld [vmem:[#allocation11 + $0x1f0] sm:$0xff]
        %v1388 = vld [vmem:[#allocation11 + $0x1f8] sm:$0xff]
        %1389 = vmatprep.subr.mxu0 %v1386
        %1390 = vmatpush1.msra.mxu0 %v1385
        %1391 = vmatprep.subr.mxu0 %v1382
        %1392 = vmatpush1.msra.mxu0 %v1381
        %1393 = vmatprep.subr.mxu0 %v1378
        %1394 = vmatpush1.msra.mxu0 %v1377
        %1395 = vmatprep.subr.mxu0 %v1374
        %1396 = vmatpush1.msra.mxu0 %v1373
        %1397 = vmatprep.subr.mxu0 %v1370
        %1398 = vmatpush1.msra.mxu0 %v1369
        %1399 = vmatprep.subr.mxu0 %v1366
        %1400 = vmatpush1.msra.mxu0 %v1365
        %1401 = vmatprep.subr.mxu0 %v1362
        %1402 = vmatpush1.msra.mxu0 %v1361
        %1403 = vmatprep.subr.mxu0 %v1358
        %1404 = vmatpush1.msra.mxu0 %v1357
        %1405 = vmatprep.subr.mxu0 %v1354
        %1406 = vmatpush1.msra.mxu0 %v1353
        %1407 = vmatprep.subr.mxu0 %v1350
        %1408 = vmatpush1.msra.mxu0 %v1349
        %1409 = vmatprep.subr.mxu0 %v1346
        %1410 = vmatpush1.msra.mxu0 %v1345
        %1411 = vmatprep.subr.mxu0 %v1342
        %1412 = vmatpush1.msra.mxu0 %v1341
        %1413 = vmatprep.subr.mxu0 %v1338
        %1414 = vmatpush1.msra.mxu0 %v1337
        %1415 = vmatprep.subr.mxu0 %v1334
        %1416 = vmatpush1.msra.mxu0 %v1333
        %1417 = vmatprep.subr.mxu0 %v1330
        %1418 = vmatpush1.msra.mxu0 %v1329
        %1419 = vmatprep.subr.mxu0 %v1326
        %1420 = vmatpush1.msra.mxu0 %v1325
        %1421 = vmatprep.subr.mxu0 0.0
        %1422 = vmatpush2.msra.mxu0 0.0
        %1423 = vmatprep.subr.mxu0 0.0
        %1424 = vmatpush2.msra.mxu0 0.0
        %1425 = vmatprep.subr.mxu0 0.0
        %1426 = vmatpush2.msra.mxu0 0.0
        %1427 = vmatprep.subr.mxu0 0.0
        %1428 = vmatpush2.msra.mxu0 0.0
        %1429 = vmatprep.subr.mxu0 0.0
        %1430 = vmatpush2.msra.mxu0 0.0
        %1431 = vmatprep.subr.mxu0 0.0
        %1432 = vmatpush2.msra.mxu0 0.0
        %1433 = vmatprep.subr.mxu0 0.0
        %1434 = vmatpush2.msra.mxu0 0.0
        %1435 = vmatprep.subr.mxu0 0.0
        %1436 = vmatpush2.msra.mxu0 0.0
        %1437 = vmatprep.subr.mxu0 0.0
        %1438 = vmatpush2.msra.mxu0 0.0
        %1439 = vmatprep.subr.mxu0 0.0
        %1440 = vmatpush2.msra.mxu0 0.0
        %1441 = vmatprep.subr.mxu0 0.0
        %1442 = vmatpush2.msra.mxu0 0.0
        %1443 = vmatprep.subr.mxu0 0.0
        %1444 = vmatpush2.msra.mxu0 0.0
        %1445 = vmatprep.subr.mxu0 0.0
        %1446 = vmatpush2.msra.mxu0 0.0
        %1447 = vmatprep.subr.mxu0 0.0
        %1448 = vmatpush2.msra.mxu0 0.0
        %1449 = vmatprep.subr.mxu0 0.0
        %1450 = vmatpush2.msra.mxu0 0.0
        %1451 = vmatprep.subr.mxu0 0.0
        %1452 = vmatpush2.msra.mxu0 0.0
        %1453 = vmatprep.mubr.f32.mxu0 0.0
        %1454 = vmatmul.mubr.f32.gmra.mxu0 %v1315
        %v1455 = vpop.f32.mrf.mxu0
        %v1456 = vadd.f32 0.0, %v1455
        %v1457 = vpop.f32.mrf.mxu0
        %v1458 = vadd.f32 0.0, %v1457
        %1459 = vdwg.mxu0
        %1460 = vmatprep.subr.mxu0 %v1388
        %1461 = vmatpush1.msra.mxu0 %v1387
        %1462 = vmatprep.subr.mxu0 %v1384
        %1463 = vmatpush1.msra.mxu0 %v1383
        %1464 = vmatprep.subr.mxu0 %v1380
        %1465 = vmatpush1.msra.mxu0 %v1379
        %1466 = vmatprep.subr.mxu0 %v1376
        %1467 = vmatpush1.msra.mxu0 %v1375
        %1468 = vmatprep.subr.mxu0 %v1372
        %1469 = vmatpush1.msra.mxu0 %v1371
        %1470 = vmatprep.subr.mxu0 %v1368
        %1471 = vmatpush1.msra.mxu0 %v1367
        %1472 = vmatprep.subr.mxu0 %v1364
        %1473 = vmatpush1.msra.mxu0 %v1363
        %1474 = vmatprep.subr.mxu0 %v1360
        %1475 = vmatpush1.msra.mxu0 %v1359
        %1476 = vmatprep.subr.mxu0 %v1356
        %1477 = vmatpush1.msra.mxu0 %v1355
        %1478 = vmatprep.subr.mxu0 %v1352
        %1479 = vmatpush1.msra.mxu0 %v1351
        %1480 = vmatprep.subr.mxu0 %v1348
        %1481 = vmatpush1.msra.mxu0 %v1347
        %1482 = vmatprep.subr.mxu0 %v1344
        %1483 = vmatpush1.msra.mxu0 %v1343
        %1484 = vmatprep.subr.mxu0 %v1340
        %1485 = vmatpush1.msra.mxu0 %v1339
        %1486 = vmatprep.subr.mxu0 %v1336
        %1487 = vmatpush1.msra.mxu0 %v1335
        %1488 = vmatprep.subr.mxu0 %v1332
        %1489 = vmatpush1.msra.mxu0 %v1331
        %1490 = vmatprep.subr.mxu0 %v1328
        %1491 = vmatpush1.msra.mxu0 %v1327
        %1492 = vmatprep.subr.mxu0 0.0
        %1493 = vmatpush2.msra.mxu0 0.0
        %1494 = vmatprep.subr.mxu0 0.0
        %1495 = vmatpush2.msra.mxu0 0.0
        %1496 = vmatprep.subr.mxu0 0.0
        %1497 = vmatpush2.msra.mxu0 0.0
        %1498 = vmatprep.subr.mxu0 0.0
        %1499 = vmatpush2.msra.mxu0 0.0
        %1500 = vmatprep.subr.mxu0 0.0
        %1501 = vmatpush2.msra.mxu0 0.0
        %1502 = vmatprep.subr.mxu0 0.0
        %1503 = vmatpush2.msra.mxu0 0.0
        %1504 = vmatprep.subr.mxu0 0.0
        %1505 = vmatpush2.msra.mxu0 0.0
        %1506 = vmatprep.subr.mxu0 0.0
        %1507 = vmatpush2.msra.mxu0 0.0
        %1508 = vmatprep.subr.mxu0 0.0
        %1509 = vmatpush2.msra.mxu0 0.0
        %1510 = vmatprep.subr.mxu0 0.0
        %1511 = vmatpush2.msra.mxu0 0.0
        %1512 = vmatprep.subr.mxu0 0.0
        %1513 = vmatpush2.msra.mxu0 0.0
        %1514 = vmatprep.subr.mxu0 0.0
        %1515 = vmatpush2.msra.mxu0 0.0
        %1516 = vmatprep.subr.mxu0 0.0
        %1517 = vmatpush2.msra.mxu0 0.0
        %1518 = vmatprep.subr.mxu0 0.0
        %1519 = vmatpush2.msra.mxu0 0.0
        %1520 = vmatprep.subr.mxu0 0.0
        %1521 = vmatpush2.msra.mxu0 0.0
        %1522 = vmatprep.subr.mxu0 0.0
        %1523 = vmatpush2.msra.mxu0 0.0
        %1524 = vmatprep.mubr.f32.mxu0 0.0
        %1525 = vmatmul.mubr.f32.gmra.mxu0 %v1315
        %v1526 = vpop.f32.mrf.mxu0
        %v1527 = vadd.f32 0.0, %v1526
        %v1528 = vpop.f32.mrf.mxu0
        %v1529 = vadd.f32 0.0, %v1528
        %1530 = vdwg.mxu0
        %v1531 = vadd.f32 %v1321, %v1456
        %v1532 = vadd.f32 %v1322, %v1458
        %v1533 = vadd.f32 %v1323, %v1527
        %v1534 = vadd.f32 %v1324, %v1529
        %v1535 = vmul.f32 %v1531, 0.5
        %v1536 = vmul.f32 %v1532, 0.5
        %v1537 = vmul.f32 %v1533, 0.5
        %v1538 = vtanh.pop %v1535
        %v1539 = vtanh.pop %v1536
        %v1540 = vtanh.pop %v1537
        %v1541 = vmul.f32 %v1538, 0.5
        %v1542 = vmul.f32 %v1539, 0.5
        %v1543 = vmul.f32 %v1540, 0.5
        %v1544 = vadd.f32 %v1541, 0.5
        %v1545 = vadd.f32 %v1542, 0.5
        %v1546 = vadd.f32 %v1543, 0.5
        %v1547 = vtanh.pop %v1534
        %v1548 = vmul.f32 %v1545, %v1313
        %v1549 = vmul.f32 %v1544, %v1547
        %v1550 = vadd.f32 %v1548, %v1549
        %v1551 = vtanh.pop %v1550
        %v1552 = vmul.f32 %v1546, %v1551
        %s1553 = scalar_lea.vmem [#allocation5], 24
        %1554 = vst [vmem:[%s1553] sm:$0xff] %v1552
        %1555 = vst [vmem:[#allocation2] sm:$0xff] %v1552
        %1556 = vst [vmem:[#allocation3] sm:$0xff] %v1550
        %v1557 = vld [vmem:[#allocation5] sm:$0xff]
        %v1558 = vld [vmem:[#allocation5 + $0x8] sm:$0xff]
        %v1559 = vld [vmem:[#allocation5 + $0x10] sm:$0xff]
        %v1560 = vld [vmem:[#allocation5 + $0x18] sm:$0xff]
        %v1561 = vld [vmem:[#allocation12] sm:$0xff]
        %v1562 = vld [vmem:[#allocation12 + $0x8] sm:$0xff]
        %v1563 = vld [vmem:[#allocation12 + $0x10] sm:$0xff]
        %v1564 = vld [vmem:[#allocation12 + $0x18] sm:$0xff]
        %v1565 = vld [vmem:[#allocation12 + $0x20] sm:$0xff]
        %v1566 = vld [vmem:[#allocation12 + $0x28] sm:$0xff]
        %v1567 = vld [vmem:[#allocation12 + $0x30] sm:$0xff]
        %v1568 = vld [vmem:[#allocation12 + $0x38] sm:$0xff]
        %v1569 = vld [vmem:[#allocation12 + $0x40] sm:$0xff]
        %v1570 = vld [vmem:[#allocation12 + $0x48] sm:$0xff]
        %v1571 = vld [vmem:[#allocation12 + $0x50] sm:$0xff]
        %v1572 = vld [vmem:[#allocation12 + $0x58] sm:$0xff]
        %v1573 = vld [vmem:[#allocation12 + $0x60] sm:$0xff]
        %v1574 = vld [vmem:[#allocation12 + $0x68] sm:$0xff]
        %v1575 = vld [vmem:[#allocation12 + $0x70] sm:$0xff]
        %v1576 = vld [vmem:[#allocation12 + $0x78] sm:$0xff]
        %v1577 = vld [vmem:[%s5] sm:$0x1]
        %v1579 = vlaneseq
        %v1580 = vshrl.u32 %v1579, 7
        %v1581 = vsub.s32 0, %v1580
        %v1582 = vrot.slane %v1577, %v1581
        %1584 = vmatprep.subr.mxu0 0.0
        %1585 = vmatpush1.msra.mxu0 %v1576
        %1586 = vmatprep.subr.mxu0 0.0
        %1587 = vmatpush1.msra.mxu0 %v1575
        %1588 = vmatprep.subr.mxu0 0.0
        %1589 = vmatpush1.msra.mxu0 %v1574
        %1590 = vmatprep.subr.mxu0 0.0
        %1591 = vmatpush1.msra.mxu0 %v1573
        %1592 = vmatprep.subr.mxu0 0.0
        %1593 = vmatpush1.msra.mxu0 %v1572
        %1594 = vmatprep.subr.mxu0 0.0
        %1595 = vmatpush1.msra.mxu0 %v1571
        %1596 = vmatprep.subr.mxu0 0.0
        %1597 = vmatpush1.msra.mxu0 %v1570
        %1598 = vmatprep.subr.mxu0 0.0
        %1599 = vmatpush1.msra.mxu0 %v1569
        %1600 = vmatprep.subr.mxu0 0.0
        %1601 = vmatpush1.msra.mxu0 %v1568
        %1602 = vmatprep.subr.mxu0 0.0
        %1603 = vmatpush1.msra.mxu0 %v1567
        %1604 = vmatprep.subr.mxu0 0.0
        %1605 = vmatpush1.msra.mxu0 %v1566
        %1606 = vmatprep.subr.mxu0 0.0
        %1607 = vmatpush1.msra.mxu0 %v1565
        %1608 = vmatprep.subr.mxu0 0.0
        %1609 = vmatpush1.msra.mxu0 %v1564
        %1610 = vmatprep.subr.mxu0 0.0
        %1611 = vmatpush1.msra.mxu0 %v1563
        %1612 = vmatprep.subr.mxu0 0.0
        %1613 = vmatpush1.msra.mxu0 %v1562
        %1614 = vmatprep.subr.mxu0 0.0
        %1615 = vmatpush1.msra.mxu0 %v1561
        %1616 = vmatprep.subr.mxu0 0.0
        %1617 = vmatpush2.msra.mxu0 0.0
        %1618 = vmatprep.subr.mxu0 0.0
        %1619 = vmatpush2.msra.mxu0 0.0
        %1620 = vmatprep.subr.mxu0 0.0
        %1621 = vmatpush2.msra.mxu0 0.0
        %1622 = vmatprep.subr.mxu0 0.0
        %1623 = vmatpush2.msra.mxu0 0.0
        %1624 = vmatprep.subr.mxu0 0.0
        %1625 = vmatpush2.msra.mxu0 0.0
        %1626 = vmatprep.subr.mxu0 0.0
        %1627 = vmatpush2.msra.mxu0 0.0
        %1628 = vmatprep.subr.mxu0 0.0
        %1629 = vmatpush2.msra.mxu0 0.0
        %1630 = vmatprep.subr.mxu0 0.0
        %1631 = vmatpush2.msra.mxu0 0.0
        %1632 = vmatprep.subr.mxu0 0.0
        %1633 = vmatpush2.msra.mxu0 0.0
        %1634 = vmatprep.subr.mxu0 0.0
        %1635 = vmatpush2.msra.mxu0 0.0
        %1636 = vmatprep.subr.mxu0 0.0
        %1637 = vmatpush2.msra.mxu0 0.0
        %1638 = vmatprep.subr.mxu0 0.0
        %1639 = vmatpush2.msra.mxu0 0.0
        %1640 = vmatprep.subr.mxu0 0.0
        %1641 = vmatpush2.msra.mxu0 0.0
        %1642 = vmatprep.subr.mxu0 0.0
        %1643 = vmatpush2.msra.mxu0 0.0
        %1644 = vmatprep.subr.mxu0 0.0
        %1645 = vmatpush2.msra.mxu0 0.0
        %1646 = vmatprep.subr.mxu0 0.0
        %1647 = vmatpush2.msra.mxu0 0.0
        %1648 = vmatprep.mubr.f32.mxu0 0.0
        %1649 = vmatmul.mubr.f32.gmra.mxu0 %v1557
        %v1650 = vpop.f32.mrf.mxu0
        %v1651 = vadd.f32 %v1582, %v1650
        %v1652 = vpop.f32.mrf.mxu0
        %1653 = vmatprep.mubr.f32.mxu0 0.0
        %1654 = vmatmul.mubr.f32.gmra.mxu0 %v1558
        %v1655 = vpop.f32.mrf.mxu0
        %v1656 = vadd.f32 %v1582, %v1655
        %v1657 = vpop.f32.mrf.mxu0
        %1658 = vmatprep.mubr.f32.mxu0 0.0
        %1659 = vmatmul.mubr.f32.gmra.mxu0 %v1559
        %v1660 = vpop.f32.mrf.mxu0
        %v1661 = vadd.f32 %v1582, %v1660
        %v1662 = vpop.f32.mrf.mxu0
        %1663 = vmatprep.mubr.f32.mxu0 0.0
        %1664 = vmatmul.mubr.f32.gmra.mxu0 %v1560
        %v1665 = vpop.f32.mrf.mxu0
        %v1666 = vadd.f32 %v1582, %v1665
        %v1667 = vpop.f32.mrf.mxu0
        %1668 = vdwg.mxu0
        %1669 = vst [vmem:[%s313] sm:$0xff] %v1651
        %1670 = vst [vmem:[%s313 + $0x8] sm:$0xff] %v1656
        %1671 = vst [vmem:[%s313 + $0x10] sm:$0xff] %v1661
        %1672 = vst [vmem:[%s313 + $0x18] sm:$0xff] %v1666
        %s1673 = sand.u32 %s164, 1
        %s1674 = scalar_lea.sflag [#allocation8], %s1673
        %s1675 = sand.u32 %s164, 1
        %s1676 = smul.addr %s1675, 32
        %s1677 = scalar_lea.vmem [#allocation14], %s1676
        // Predicated region
        $region65: #{tpu_custom_call.1} parent=43 // pred_check
          %p1678 = pneg %p174
        $region66: #{tpu_custom_call.1} parent=43 // pred_check_branch
          %1680 = sbr.rel (%p1678) target = $region68
        $region67: #{tpu_custom_call.1} parent=43 // pred_region
          %s1681 = smul.u32 4, %s25
          %s1683 = ssub.s32 512, 512
          %1684 = vsyncadd %s1674, %s1683
          %s1685 = smul.addr %s1681, 128
          %s1686 = scalar_lea.hbm %s6, %s1685
          %s1687 = sshll.u32 %s1677, 4
          %s1688 = int_to_ptr.vmem [resolvable:$true] %s1687
          %1693 = dma.vmem_to_hbm [thread:$0]  %s1688, 512, %s1686, %s1674, 128, 128, 8
        $region68: #{tpu_custom_call.1} parent=43 // pred_fallthru
          _
      $region44: #{tpu_custom_call.1} parent=5 // pred_fallthru
        _
      %p1694 = scmp.le.s32.totalorder 2, %s20
      // Predicated region
      $region69: #{tpu_custom_call.1} parent=5 // pred_check
        %p1695 = pneg %p1694
      $region70: #{tpu_custom_call.1} parent=5 // pred_check_branch
        %1697 = sbr.rel (%p1695) target = $region72
      $region71: #{tpu_custom_call.1} parent=5 // pred_region
        %s1698 = ssub.s32 %s20, 2
        // Predicated region
        $region73: #{tpu_custom_call.1} parent=71 // pred_check
          %p1699 = pneg %p180
        $region74: #{tpu_custom_call.1} parent=71 // pred_check_branch
          %1701 = sbr.rel (%p1699) target = $region76
        $region75: #{tpu_custom_call.1} parent=71 // pred_region
          %s1702 = sand.u32 %s165, 1
          %s1703 = scalar_lea.sflag [#allocation8], %s1702
          %s1704 = sand.u32 %s165, 1
          %s1705 = smul.addr %s1704, 32
          %s1706 = scalar_lea.vmem [#allocation14], %s1705
          %1707 = dma.done %s1703, 512
        $region76: #{tpu_custom_call.1} parent=71 // pred_fallthru
          _
      $region72: #{tpu_custom_call.1} parent=5 // pred_fallthru
        _
    $region6: #{tpu_custom_call.1} parent=1 // loop_footer
      %s24 = sadd.s32 1, %s20
    $region7: #{tpu_custom_call.1} parent=1 // loop_footer_branch
      %19 = sbr.rel target = $region3
    $region8: #{tpu_custom_call.1} parent=1 // loop_exit
      _
    %1708 = vsyncpa [#allocation7], 1
    %s1709 = scalar_lea.sflag [#allocation7], 1
    %1710 = vsyncpa %s1709, 1
    %1711 = vsyncpa [#allocation10], 1
    %1712 = vsyncpa [#allocation13], 1
    %1713 = vsyncpa [#allocation8], 1
    %s1714 = scalar_lea.sflag [#allocation8], 1
    %1715 = vsyncpa %s1714, 1

</llo_original>
